<compile_context>
chip_gen: v7x
topology: tpu7x:2x2x1
jax: 0.10.0
libtpu: 0.0.40
codegen_flags: <defaults>
</compile_context>

<pallas_src>
import functools
import math

import jax
import jax.numpy as jnp
from jax.experimental import pallas as pl
from jax.experimental.pallas import tpu as pltpu

_LOG4 = math.log(4.0)


# ----------------------------- Pallas kernel --------------------------------
def _realnvp_kernel(num_layers, kept, trans,
                    x_ref, a1_ref, b1_ref, w2_ref, b2_ref, w3_ref, b3_ref,
                    y_ref, logdet_ref):
    """Transposed layout: x_ref [2, Bt]; outputs y [2, Bt], logdet [1, Bt].

    kept[l]  : feature index with mask==1 (passes through, feeds the nets)
    trans[l] : feature index with mask==0 (gets transformed)
    """
    x = x_ref[...]                                   # [2, Bt]
    bt = x.shape[1]
    rows = [x[0:1, :], x[1:2, :]]                    # per-feature lane-dense rows
    logdet = jnp.zeros((1, bt), jnp.float32)

    for l in range(num_layers):                      # few layers -> static unroll
        k, tr = kept[l], trans[l]

        # fused net layer 1: effective fan-in is 1 thanks to the mask -> VPU FMA
        h = jnp.maximum(a1_ref[l] * rows[k] + b1_ref[l], 0.0)          # [2H, Bt]

        # fused net layer 2: block-diag(sW2^T, tW2^T) matmul on the MXU
        h = jnp.maximum(
            jnp.dot(w2_ref[l], h, preferred_element_type=jnp.float32)
            + b2_ref[l], 0.0)                                          # [2H, Bt]

        # fused net layer 3: only the unmasked output column of each net
        st = (jnp.dot(w3_ref[l], h, preferred_element_type=jnp.float32)
              + b3_ref[l])                                             # [8, Bt]
        s = jnp.tanh(st[0:1, :])                                       # [1, Bt]
        t = st[1:2, :]                                                 # [1, Bt]

        # affine coupling: only the "trans" feature changes (EUP exp is free slot)
        rows[tr] = rows[tr] * jnp.exp(s) + t
        logdet = logdet + s                       # sum over D collapses to s row

    # final normalisation: y = 4*tanh(y), logdet += sum(log(4*(1-tanh^2)))
    # single EUP pass over the stacked [2, Bt] slab, rows stored directly.
    yy = jnp.concatenate([rows[0], rows[1]], axis=0)                   # [2, Bt]
    th = jnp.tanh(yy)                                                  # [2, Bt]
    y_ref[...] = 4.0 * th
    l1p = jnp.log1p(-th * th)                                          # [2, Bt]
    logdet_ref[...] = logdet + 2.0 * _LOG4 + l1p[0:1, :] + l1p[1:2, :]


# ------------------------- static mask handling ------------------------------
def _mask_indices(mask):
    m = [float(v) for v in mask]
    if sorted(m) != [0.0, 1.0]:
        raise ValueError("RealNVP2D Pallas kernel expects binary 2-D masks "
                         "with exactly one 0 and one 1 per layer")
    k = m.index(1.0)           # kept (net input) feature
    return k, 1 - k            # (kept, transformed)


# --------------------------- weight packing -----------------------------------
def pack_params(params, masks):
    """Fuse scale/translate nets and pre-slice by the static masks."""
    L = len(masks)
    H = params["sW1"].shape[-1]
    kept, trans = zip(*[_mask_indices(m) for m in masks])
    zHH = jnp.zeros((H, H), jnp.float32)
    zH = jnp.zeros((H,), jnp.float32)

    a1, b1, w2, b2, w3, b3 = [], [], [], [], [], []
    for l in range(L):
        k, t = kept[l], trans[l]
        # layer-1: only the "kept" input row matters (other input is zeroed)
        a1.append(jnp.concatenate([params["sW1"][l, k],
                                   params["tW1"][l, k]])[:, None])       # [2H,1]
        b1.append(jnp.concatenate([params["sb1"][l],
                                   params["tb1"][l]])[:, None])          # [2H,1]
        # layer-2: block-diagonal, transposed for [out,in] @ [in,B]
        w2.append(jnp.block([[params["sW2"][l].T, zHH],
                             [zHH, params["tW2"][l].T]]))                # [2H,2H]
        b2.append(jnp.concatenate([params["sb2"][l],
                                   params["tb2"][l]])[:, None])          # [2H,1]
        # layer-3: only the "trans" output column of each net, padded to 8 rows
        row_s = jnp.concatenate([params["sW3"][l, :, t], zH])
        row_t = jnp.concatenate([zH, params["tW3"][l, :, t]])
        w3_l = jnp.zeros((8, 2 * H), jnp.float32)
        w3_l = w3_l.at[0].set(row_s).at[1].set(row_t)
        w3.append(w3_l)                                                  # [8,2H]
        b3_l = jnp.zeros((8, 1), jnp.float32)
        b3_l = b3_l.at[0, 0].set(params["sb3"][l, t])
        b3_l = b3_l.at[1, 0].set(params["tb3"][l, t])
        b3.append(b3_l)                                                  # [8,1]

    stack = lambda xs: jnp.stack(xs, axis=0)
    packed = dict(a1=stack(a1), b1=stack(b1), w2=stack(w2), b2=stack(b2),
                  w3=stack(w3), b3=stack(b3))
    return packed, tuple(kept), tuple(trans)


# ------------------------------ wrapper ---------------------------------------
def realnvp2d_forward(x, params, masks, *, b_tile=2048):
    """x: [B, 2] float32; params: dict of stacked per-layer weights."""
    B, D = x.shape
    assert D == 2, "RealNVP2D models 2-D distributions"
    L = len(masks)
    packed, kept, trans = pack_params(params, masks)

    # Batch goes on the lane axis; pad to a lane-aligned tile size.
    # Large tiles amortise the ~0.35 us per-grid-step overhead; the whole
    # working set (2*bt activations + a few KiB of weights) is tiny in VMEM.
    bt = b_tile if B > b_tile else max(128, pl.cdiv(B, 128) * 128)
    Bp = pl.cdiv(B, bt) * bt
    xT = jnp.zeros((2, Bp), jnp.float32).at[:, :B].set(x.T.astype(jnp.float32))

    kernel = functools.partial(_realnvp_kernel, L, kept, trans)

    def const_spec(arr):
        nd = arr.ndim
        # full-array block, constant index -> stays VMEM-resident across grid
        return pl.BlockSpec(arr.shape, lambda i, _nd=nd: (0,) * _nd)

    weight_args = (packed["a1"], packed["b1"], packed["w2"], packed["b2"],
                   packed["w3"], packed["b3"])

    yT, logdetT = pl.pallas_call(
        kernel,
        out_shape=(jax.ShapeDtypeStruct((2, Bp), jnp.float32),
                   jax.ShapeDtypeStruct((1, Bp), jnp.float32)),
        grid=(Bp // bt,),
        in_specs=[pl.BlockSpec((2, bt), lambda i: (0, i))]
                 + [const_spec(w) for w in weight_args],
        out_specs=(pl.BlockSpec((2, bt), lambda i: (0, i)),
                   pl.BlockSpec((1, bt), lambda i: (0, i))),
        compiler_params=pltpu.CompilerParams(
            dimension_semantics=("parallel",)),
    )(xT, *weight_args)

    return yT[:, :B].T, logdetT[0, :B]


# ------------------------ deterministic param init ---------------------------
def init_params(key, masks, hidden_dim):
    L, D = len(masks), len(masks[0])
    H = hidden_dim

    def linear(k, fan_in, fan_out):
        kw, kb = jax.random.split(k)
        bound = 1.0 / jnp.sqrt(float(fan_in))
        W = jax.random.uniform(kw, (fan_in, fan_out), jnp.float32, -bound, bound)
        b = jax.random.uniform(kb, (fan_out,), jnp.float32, -bound, bound)
        return W, b

    keys = jax.random.split(key, L * 6).reshape(L, 6, 2)
    acc = {n: [] for n in ("sW1", "sb1", "sW2", "sb2", "sW3", "sb3",
                           "tW1", "tb1", "tW2", "tb2", "tW3", "tb3")}
    for l in range(L):
        for i, (name_w, name_b, fi, fo) in enumerate(
                [("sW1", "sb1", D, H), ("sW2", "sb2", H, H), ("sW3", "sb3", H, D),
                 ("tW1", "tb1", D, H), ("tW2", "tb2", H, H), ("tW3", "tb3", H, D)]):
            w, b = linear(keys[l, i], fi, fo)
            acc[name_w].append(w)
            acc[name_b].append(b)
    return {k: jnp.stack(v, axis=0) for k, v in acc.items()}


# --------------------------- pure-JAX reference -------------------------------
def realnvp2d_reference(x, params, masks):
    masks = jnp.asarray(masks, jnp.float32)
    y = x
    logdet = jnp.zeros((x.shape[0],), jnp.float32)
    for l in range(masks.shape[0]):
        m = masks[l]
        xm = y * m
        h = jax.nn.relu(xm @ params["sW1"][l] + params["sb1"][l])
        h = jax.nn.relu(h @ params["sW2"][l] + params["sb2"][l])
        s = jnp.tanh(h @ params["sW3"][l] + params["sb3"][l]) * (1 - m)
        h = jax.nn.relu(xm @ params["tW1"][l] + params["tb1"][l])
        h = jax.nn.relu(h @ params["tW2"][l] + params["tb2"][l])
        t = (h @ params["tW3"][l] + params["tb3"][l]) * (1 - m)
        y = xm + (1 - m) * (y * jnp.exp(s) + t)
        logdet = logdet + jnp.sum(s, axis=-1)
    norm = jnp.sum(jnp.log(jnp.abs(4.0 * (1.0 - jnp.tanh(y) ** 2))), axis=-1)
    return 4.0 * jnp.tanh(y), logdet + norm


# --------------------------------- main ---------------------------------------
if __name__ == "__main__":
    B, D, H = 8, 2, 32
    masks = [[0.0, 1.0], [1.0, 0.0], [0.0, 1.0], [1.0, 0.0]]   # 4 coupling layers

    key = jax.random.PRNGKey(0)
    kx, kp = jax.random.split(key)
    x = jax.random.normal(kx, (B, D), dtype=jnp.float32)
    params = init_params(kp, masks, H)

    y, logdet = realnvp2d_forward(x, params, masks)
    y = jax.block_until_ready(y)
    logdet = jax.block_until_ready(logdet)

    y_ref, logdet_ref = realnvp2d_reference(x, params, masks)
    assert jnp.allclose(y, y_ref, atol=2e-4, rtol=2e-4), "y mismatch"
    assert jnp.allclose(logdet, logdet_ref, atol=2e-4, rtol=2e-4), "logdet mismatch"

    print("KERNEL_OK")
</pallas_src>

<mosaic_0001>
module attributes {stable_mosaic.version = 11 : i64} {
  func.func @_realnvp_kernel(%arg0: i32, %arg1: memref<2x128xf32, #tpu.memory_space<vmem>>, %arg2: memref<4x64x1xf32, #tpu.memory_space<vmem>>, %arg3: memref<4x64x1xf32, #tpu.memory_space<vmem>>, %arg4: memref<4x64x64xf32, #tpu.memory_space<vmem>>, %arg5: memref<4x64x1xf32, #tpu.memory_space<vmem>>, %arg6: memref<4x8x64xf32, #tpu.memory_space<vmem>>, %arg7: memref<4x8x1xf32, #tpu.memory_space<vmem>>, %arg8: memref<2x128xf32, #tpu.memory_space<vmem>>, %arg9: memref<1x128xf32, #tpu.memory_space<vmem>>) attributes {dimension_semantics = [#tpu.dimension_semantics<parallel>], iteration_bounds = array<i64: 1>, scalar_prefetch = 0 : i64, scratch_operands = 0 : i64, tpu.core_type = #tpu.core_type<tc>, window_params = [{transform_indices = @transform_0, window_bounds = array<i64: 2, 128>}, {pipeline_mode = #tpu.pipeline_mode<synchronous>, transform_indices = @transform_1, window_bounds = array<i64: 4, 64, 1>}, {pipeline_mode = #tpu.pipeline_mode<synchronous>, transform_indices = @transform_2, window_bounds = array<i64: 4, 64, 1>}, {pipeline_mode = #tpu.pipeline_mode<synchronous>, transform_indices = @transform_3, window_bounds = array<i64: 4, 64, 64>}, {pipeline_mode = #tpu.pipeline_mode<synchronous>, transform_indices = @transform_4, window_bounds = array<i64: 4, 64, 1>}, {pipeline_mode = #tpu.pipeline_mode<synchronous>, transform_indices = @transform_5, window_bounds = array<i64: 4, 8, 64>}, {pipeline_mode = #tpu.pipeline_mode<synchronous>, transform_indices = @transform_6, window_bounds = array<i64: 4, 8, 1>}, {transform_indices = @transform_7, window_bounds = array<i64: 2, 128>}, {transform_indices = @transform_8, window_bounds = array<i64: 1, 128>}]} {
    %c0 = arith.constant 0 : index
    %c0_0 = arith.constant 0 : index
    %0 = vector.load %arg1[%c0, %c0_0] : memref<2x128xf32, #tpu.memory_space<vmem>>, vector<2x128xf32>
    %1 = vector.extract_strided_slice %0 {offsets = [0, 0], sizes = [1, 128], strides = [1, 1]} : vector<2x128xf32> to vector<1x128xf32>
    %2 = vector.extract_strided_slice %0 {offsets = [1, 0], sizes = [1, 128], strides = [1, 1]} : vector<2x128xf32> to vector<1x128xf32>
    %cst = arith.constant 0.000000e+00 : f32
    %3 = vector.broadcast %cst : f32 to vector<1x128xf32>
    %c0_1 = arith.constant 0 : index
    %c0_2 = arith.constant 0 : index
    %c0_3 = arith.constant 0 : index
    %4 = vector.load %arg2[%c0_1, %c0_2, %c0_3] : memref<4x64x1xf32, #tpu.memory_space<vmem>>, vector<1x64x1xf32>
    %5 = vector.shape_cast %4 : vector<1x64x1xf32> to vector<64x1xf32>
    %6 = vector.broadcast %5 : vector<64x1xf32> to vector<64x128xf32>
    %7 = vector.broadcast %2 : vector<1x128xf32> to vector<64x128xf32>
    %8 = arith.mulf %6, %7 : vector<64x128xf32>
    %c0_4 = arith.constant 0 : index
    %c0_5 = arith.constant 0 : index
    %c0_6 = arith.constant 0 : index
    %9 = vector.load %arg3[%c0_4, %c0_5, %c0_6] : memref<4x64x1xf32, #tpu.memory_space<vmem>>, vector<1x64x1xf32>
    %10 = vector.shape_cast %9 : vector<1x64x1xf32> to vector<64x1xf32>
    %11 = vector.broadcast %10 : vector<64x1xf32> to vector<64x128xf32>
    %12 = arith.addf %8, %11 : vector<64x128xf32>
    %cst_7 = arith.constant 0.000000e+00 : f32
    %13 = vector.broadcast %cst_7 : f32 to vector<64x128xf32>
    %14 = arith.maximumf %12, %13 : vector<64x128xf32>
    %c0_8 = arith.constant 0 : index
    %c0_9 = arith.constant 0 : index
    %c0_10 = arith.constant 0 : index
    %15 = vector.load %arg4[%c0_8, %c0_9, %c0_10] : memref<4x64x64xf32, #tpu.memory_space<vmem>>, vector<1x64x64xf32>
    %16 = vector.shape_cast %15 : vector<1x64x64xf32> to vector<64x64xf32>
    %cst_11 = arith.constant dense<0.000000e+00> : vector<64x128xf32>
    %17 = tpu.matmul %16, %14, %cst_11 {dimension_numbers = #tpu.dot_dimension_numbers<[1], [0], [0], [1], [0, 0, 1, 1], [], []>} : vector<64x64xf32>, vector<64x128xf32>, vector<64x128xf32> -> vector<64x128xf32>
    %c0_12 = arith.constant 0 : index
    %c0_13 = arith.constant 0 : index
    %c0_14 = arith.constant 0 : index
    %18 = vector.load %arg5[%c0_12, %c0_13, %c0_14] : memref<4x64x1xf32, #tpu.memory_space<vmem>>, vector<1x64x1xf32>
    %19 = vector.shape_cast %18 : vector<1x64x1xf32> to vector<64x1xf32>
    %20 = vector.broadcast %19 : vector<64x1xf32> to vector<64x128xf32>
    %21 = arith.addf %17, %20 : vector<64x128xf32>
    %cst_15 = arith.constant 0.000000e+00 : f32
    %22 = vector.broadcast %cst_15 : f32 to vector<64x128xf32>
    %23 = arith.maximumf %21, %22 : vector<64x128xf32>
    %c0_16 = arith.constant 0 : index
    %c0_17 = arith.constant 0 : index
    %c0_18 = arith.constant 0 : index
    %24 = vector.load %arg6[%c0_16, %c0_17, %c0_18] : memref<4x8x64xf32, #tpu.memory_space<vmem>>, vector<1x8x64xf32>
    %25 = vector.shape_cast %24 : vector<1x8x64xf32> to vector<8x64xf32>
    %cst_19 = arith.constant dense<0.000000e+00> : vector<8x128xf32>
    %26 = tpu.matmul %25, %23, %cst_19 {dimension_numbers = #tpu.dot_dimension_numbers<[1], [0], [0], [1], [0, 0, 1, 1], [], []>} : vector<8x64xf32>, vector<64x128xf32>, vector<8x128xf32> -> vector<8x128xf32>
    %c0_20 = arith.constant 0 : index
    %c0_21 = arith.constant 0 : index
    %c0_22 = arith.constant 0 : index
    %27 = vector.load %arg7[%c0_20, %c0_21, %c0_22] : memref<4x8x1xf32, #tpu.memory_space<vmem>>, vector<1x8x1xf32>
    %28 = vector.shape_cast %27 : vector<1x8x1xf32> to vector<8x1xf32>
    %29 = vector.broadcast %28 : vector<8x1xf32> to vector<8x128xf32>
    %30 = arith.addf %26, %29 : vector<8x128xf32>
    %31 = vector.extract_strided_slice %30 {offsets = [0, 0], sizes = [1, 128], strides = [1, 1]} : vector<8x128xf32> to vector<1x128xf32>
    %32 = math.tanh %31 : vector<1x128xf32>
    %33 = vector.extract_strided_slice %30 {offsets = [1, 0], sizes = [1, 128], strides = [1, 1]} : vector<8x128xf32> to vector<1x128xf32>
    %34 = math.exp %32 : vector<1x128xf32>
    %35 = arith.mulf %1, %34 : vector<1x128xf32>
    %36 = arith.addf %35, %33 : vector<1x128xf32>
    %37 = arith.addf %3, %32 : vector<1x128xf32>
    %c1 = arith.constant 1 : index
    %c0_23 = arith.constant 0 : index
    %c0_24 = arith.constant 0 : index
    %38 = vector.load %arg2[%c1, %c0_23, %c0_24] : memref<4x64x1xf32, #tpu.memory_space<vmem>>, vector<1x64x1xf32>
    %39 = vector.shape_cast %38 : vector<1x64x1xf32> to vector<64x1xf32>
    %40 = vector.broadcast %39 : vector<64x1xf32> to vector<64x128xf32>
    %41 = vector.broadcast %36 : vector<1x128xf32> to vector<64x128xf32>
    %42 = arith.mulf %40, %41 : vector<64x128xf32>
    %c1_25 = arith.constant 1 : index
    %c0_26 = arith.constant 0 : index
    %c0_27 = arith.constant 0 : index
    %43 = vector.load %arg3[%c1_25, %c0_26, %c0_27] : memref<4x64x1xf32, #tpu.memory_space<vmem>>, vector<1x64x1xf32>
    %44 = vector.shape_cast %43 : vector<1x64x1xf32> to vector<64x1xf32>
    %45 = vector.broadcast %44 : vector<64x1xf32> to vector<64x128xf32>
    %46 = arith.addf %42, %45 : vector<64x128xf32>
    %cst_28 = arith.constant 0.000000e+00 : f32
    %47 = vector.broadcast %cst_28 : f32 to vector<64x128xf32>
    %48 = arith.maximumf %46, %47 : vector<64x128xf32>
    %c1_29 = arith.constant 1 : index
    %c0_30 = arith.constant 0 : index
    %c0_31 = arith.constant 0 : index
    %49 = vector.load %arg4[%c1_29, %c0_30, %c0_31] : memref<4x64x64xf32, #tpu.memory_space<vmem>>, vector<1x64x64xf32>
    %50 = vector.shape_cast %49 : vector<1x64x64xf32> to vector<64x64xf32>
    %cst_32 = arith.constant dense<0.000000e+00> : vector<64x128xf32>
    %51 = tpu.matmul %50, %48, %cst_32 {dimension_numbers = #tpu.dot_dimension_numbers<[1], [0], [0], [1], [0, 0, 1, 1], [], []>} : vector<64x64xf32>, vector<64x128xf32>, vector<64x128xf32> -> vector<64x128xf32>
    %c1_33 = arith.constant 1 : index
    %c0_34 = arith.constant 0 : index
    %c0_35 = arith.constant 0 : index
    %52 = vector.load %arg5[%c1_33, %c0_34, %c0_35] : memref<4x64x1xf32, #tpu.memory_space<vmem>>, vector<1x64x1xf32>
    %53 = vector.shape_cast %52 : vector<1x64x1xf32> to vector<64x1xf32>
    %54 = vector.broadcast %53 : vector<64x1xf32> to vector<64x128xf32>
    %55 = arith.addf %51, %54 : vector<64x128xf32>
    %cst_36 = arith.constant 0.000000e+00 : f32
    %56 = vector.broadcast %cst_36 : f32 to vector<64x128xf32>
    %57 = arith.maximumf %55, %56 : vector<64x128xf32>
    %c1_37 = arith.constant 1 : index
    %c0_38 = arith.constant 0 : index
    %c0_39 = arith.constant 0 : index
    %58 = vector.load %arg6[%c1_37, %c0_38, %c0_39] : memref<4x8x64xf32, #tpu.memory_space<vmem>>, vector<1x8x64xf32>
    %59 = vector.shape_cast %58 : vector<1x8x64xf32> to vector<8x64xf32>
    %cst_40 = arith.constant dense<0.000000e+00> : vector<8x128xf32>
    %60 = tpu.matmul %59, %57, %cst_40 {dimension_numbers = #tpu.dot_dimension_numbers<[1], [0], [0], [1], [0, 0, 1, 1], [], []>} : vector<8x64xf32>, vector<64x128xf32>, vector<8x128xf32> -> vector<8x128xf32>
    %c1_41 = arith.constant 1 : index
    %c0_42 = arith.constant 0 : index
    %c0_43 = arith.constant 0 : index
    %61 = vector.load %arg7[%c1_41, %c0_42, %c0_43] : memref<4x8x1xf32, #tpu.memory_space<vmem>>, vector<1x8x1xf32>
    %62 = vector.shape_cast %61 : vector<1x8x1xf32> to vector<8x1xf32>
    %63 = vector.broadcast %62 : vector<8x1xf32> to vector<8x128xf32>
    %64 = arith.addf %60, %63 : vector<8x128xf32>
    %65 = vector.extract_strided_slice %64 {offsets = [0, 0], sizes = [1, 128], strides = [1, 1]} : vector<8x128xf32> to vector<1x128xf32>
    %66 = math.tanh %65 : vector<1x128xf32>
    %67 = vector.extract_strided_slice %64 {offsets = [1, 0], sizes = [1, 128], strides = [1, 1]} : vector<8x128xf32> to vector<1x128xf32>
    %68 = math.exp %66 : vector<1x128xf32>
    %69 = arith.mulf %2, %68 : vector<1x128xf32>
    %70 = arith.addf %69, %67 : vector<1x128xf32>
    %71 = arith.addf %37, %66 : vector<1x128xf32>
    %c2 = arith.constant 2 : index
    %c0_44 = arith.constant 0 : index
    %c0_45 = arith.constant 0 : index
    %72 = vector.load %arg2[%c2, %c0_44, %c0_45] : memref<4x64x1xf32, #tpu.memory_space<vmem>>, vector<1x64x1xf32>
    %73 = vector.shape_cast %72 : vector<1x64x1xf32> to vector<64x1xf32>
    %74 = vector.broadcast %73 : vector<64x1xf32> to vector<64x128xf32>
    %75 = vector.broadcast %70 : vector<1x128xf32> to vector<64x128xf32>
    %76 = arith.mulf %74, %75 : vector<64x128xf32>
    %c2_46 = arith.constant 2 : index
    %c0_47 = arith.constant 0 : index
    %c0_48 = arith.constant 0 : index
    %77 = vector.load %arg3[%c2_46, %c0_47, %c0_48] : memref<4x64x1xf32, #tpu.memory_space<vmem>>, vector<1x64x1xf32>
    %78 = vector.shape_cast %77 : vector<1x64x1xf32> to vector<64x1xf32>
    %79 = vector.broadcast %78 : vector<64x1xf32> to vector<64x128xf32>
    %80 = arith.addf %76, %79 : vector<64x128xf32>
    %cst_49 = arith.constant 0.000000e+00 : f32
    %81 = vector.broadcast %cst_49 : f32 to vector<64x128xf32>
    %82 = arith.maximumf %80, %81 : vector<64x128xf32>
    %c2_50 = arith.constant 2 : index
    %c0_51 = arith.constant 0 : index
    %c0_52 = arith.constant 0 : index
    %83 = vector.load %arg4[%c2_50, %c0_51, %c0_52] : memref<4x64x64xf32, #tpu.memory_space<vmem>>, vector<1x64x64xf32>
    %84 = vector.shape_cast %83 : vector<1x64x64xf32> to vector<64x64xf32>
    %cst_53 = arith.constant dense<0.000000e+00> : vector<64x128xf32>
    %85 = tpu.matmul %84, %82, %cst_53 {dimension_numbers = #tpu.dot_dimension_numbers<[1], [0], [0], [1], [0, 0, 1, 1], [], []>} : vector<64x64xf32>, vector<64x128xf32>, vector<64x128xf32> -> vector<64x128xf32>
    %c2_54 = arith.constant 2 : index
    %c0_55 = arith.constant 0 : index
    %c0_56 = arith.constant 0 : index
    %86 = vector.load %arg5[%c2_54, %c0_55, %c0_56] : memref<4x64x1xf32, #tpu.memory_space<vmem>>, vector<1x64x1xf32>
    %87 = vector.shape_cast %86 : vector<1x64x1xf32> to vector<64x1xf32>
    %88 = vector.broadcast %87 : vector<64x1xf32> to vector<64x128xf32>
    %89 = arith.addf %85, %88 : vector<64x128xf32>
    %cst_57 = arith.constant 0.000000e+00 : f32
    %90 = vector.broadcast %cst_57 : f32 to vector<64x128xf32>
    %91 = arith.maximumf %89, %90 : vector<64x128xf32>
    %c2_58 = arith.constant 2 : index
    %c0_59 = arith.constant 0 : index
    %c0_60 = arith.constant 0 : index
    %92 = vector.load %arg6[%c2_58, %c0_59, %c0_60] : memref<4x8x64xf32, #tpu.memory_space<vmem>>, vector<1x8x64xf32>
    %93 = vector.shape_cast %92 : vector<1x8x64xf32> to vector<8x64xf32>
    %cst_61 = arith.constant dense<0.000000e+00> : vector<8x128xf32>
    %94 = tpu.matmul %93, %91, %cst_61 {dimension_numbers = #tpu.dot_dimension_numbers<[1], [0], [0], [1], [0, 0, 1, 1], [], []>} : vector<8x64xf32>, vector<64x128xf32>, vector<8x128xf32> -> vector<8x128xf32>
    %c2_62 = arith.constant 2 : index
    %c0_63 = arith.constant 0 : index
    %c0_64 = arith.constant 0 : index
    %95 = vector.load %arg7[%c2_62, %c0_63, %c0_64] : memref<4x8x1xf32, #tpu.memory_space<vmem>>, vector<1x8x1xf32>
    %96 = vector.shape_cast %95 : vector<1x8x1xf32> to vector<8x1xf32>
    %97 = vector.broadcast %96 : vector<8x1xf32> to vector<8x128xf32>
    %98 = arith.addf %94, %97 : vector<8x128xf32>
    %99 = vector.extract_strided_slice %98 {offsets = [0, 0], sizes = [1, 128], strides = [1, 1]} : vector<8x128xf32> to vector<1x128xf32>
    %100 = math.tanh %99 : vector<1x128xf32>
    %101 = vector.extract_strided_slice %98 {offsets = [1, 0], sizes = [1, 128], strides = [1, 1]} : vector<8x128xf32> to vector<1x128xf32>
    %102 = math.exp %100 : vector<1x128xf32>
    %103 = arith.mulf %36, %102 : vector<1x128xf32>
    %104 = arith.addf %103, %101 : vector<1x128xf32>
    %105 = arith.addf %71, %100 : vector<1x128xf32>
    %c3 = arith.constant 3 : index
    %c0_65 = arith.constant 0 : index
    %c0_66 = arith.constant 0 : index
    %106 = vector.load %arg2[%c3, %c0_65, %c0_66] : memref<4x64x1xf32, #tpu.memory_space<vmem>>, vector<1x64x1xf32>
    %107 = vector.shape_cast %106 : vector<1x64x1xf32> to vector<64x1xf32>
    %108 = vector.broadcast %107 : vector<64x1xf32> to vector<64x128xf32>
    %109 = vector.broadcast %104 : vector<1x128xf32> to vector<64x128xf32>
    %110 = arith.mulf %108, %109 : vector<64x128xf32>
    %c3_67 = arith.constant 3 : index
    %c0_68 = arith.constant 0 : index
    %c0_69 = arith.constant 0 : index
    %111 = vector.load %arg3[%c3_67, %c0_68, %c0_69] : memref<4x64x1xf32, #tpu.memory_space<vmem>>, vector<1x64x1xf32>
    %112 = vector.shape_cast %111 : vector<1x64x1xf32> to vector<64x1xf32>
    %113 = vector.broadcast %112 : vector<64x1xf32> to vector<64x128xf32>
    %114 = arith.addf %110, %113 : vector<64x128xf32>
    %cst_70 = arith.constant 0.000000e+00 : f32
    %115 = vector.broadcast %cst_70 : f32 to vector<64x128xf32>
    %116 = arith.maximumf %114, %115 : vector<64x128xf32>
    %c3_71 = arith.constant 3 : index
    %c0_72 = arith.constant 0 : index
    %c0_73 = arith.constant 0 : index
    %117 = vector.load %arg4[%c3_71, %c0_72, %c0_73] : memref<4x64x64xf32, #tpu.memory_space<vmem>>, vector<1x64x64xf32>
    %118 = vector.shape_cast %117 : vector<1x64x64xf32> to vector<64x64xf32>
    %cst_74 = arith.constant dense<0.000000e+00> : vector<64x128xf32>
    %119 = tpu.matmul %118, %116, %cst_74 {dimension_numbers = #tpu.dot_dimension_numbers<[1], [0], [0], [1], [0, 0, 1, 1], [], []>} : vector<64x64xf32>, vector<64x128xf32>, vector<64x128xf32> -> vector<64x128xf32>
    %c3_75 = arith.constant 3 : index
    %c0_76 = arith.constant 0 : index
    %c0_77 = arith.constant 0 : index
    %120 = vector.load %arg5[%c3_75, %c0_76, %c0_77] : memref<4x64x1xf32, #tpu.memory_space<vmem>>, vector<1x64x1xf32>
    %121 = vector.shape_cast %120 : vector<1x64x1xf32> to vector<64x1xf32>
    %122 = vector.broadcast %121 : vector<64x1xf32> to vector<64x128xf32>
    %123 = arith.addf %119, %122 : vector<64x128xf32>
    %cst_78 = arith.constant 0.000000e+00 : f32
    %124 = vector.broadcast %cst_78 : f32 to vector<64x128xf32>
    %125 = arith.maximumf %123, %124 : vector<64x128xf32>
    %c3_79 = arith.constant 3 : index
    %c0_80 = arith.constant 0 : index
    %c0_81 = arith.constant 0 : index
    %126 = vector.load %arg6[%c3_79, %c0_80, %c0_81] : memref<4x8x64xf32, #tpu.memory_space<vmem>>, vector<1x8x64xf32>
    %127 = vector.shape_cast %126 : vector<1x8x64xf32> to vector<8x64xf32>
    %cst_82 = arith.constant dense<0.000000e+00> : vector<8x128xf32>
    %128 = tpu.matmul %127, %125, %cst_82 {dimension_numbers = #tpu.dot_dimension_numbers<[1], [0], [0], [1], [0, 0, 1, 1], [], []>} : vector<8x64xf32>, vector<64x128xf32>, vector<8x128xf32> -> vector<8x128xf32>
    %c3_83 = arith.constant 3 : index
    %c0_84 = arith.constant 0 : index
    %c0_85 = arith.constant 0 : index
    %129 = vector.load %arg7[%c3_83, %c0_84, %c0_85] : memref<4x8x1xf32, #tpu.memory_space<vmem>>, vector<1x8x1xf32>
    %130 = vector.shape_cast %129 : vector<1x8x1xf32> to vector<8x1xf32>
    %131 = vector.broadcast %130 : vector<8x1xf32> to vector<8x128xf32>
    %132 = arith.addf %128, %131 : vector<8x128xf32>
    %133 = vector.extract_strided_slice %132 {offsets = [0, 0], sizes = [1, 128], strides = [1, 1]} : vector<8x128xf32> to vector<1x128xf32>
    %134 = math.tanh %133 : vector<1x128xf32>
    %135 = vector.extract_strided_slice %132 {offsets = [1, 0], sizes = [1, 128], strides = [1, 1]} : vector<8x128xf32> to vector<1x128xf32>
    %136 = math.exp %134 : vector<1x128xf32>
    %137 = arith.mulf %70, %136 : vector<1x128xf32>
    %138 = arith.addf %137, %135 : vector<1x128xf32>
    %139 = arith.addf %105, %134 : vector<1x128xf32>
    %140 = tpu.concatenate %104, %138 in 0 : vector<1x128xf32>, vector<1x128xf32> -> vector<2x128xf32>
    %141 = math.tanh %140 : vector<2x128xf32>
    %cst_86 = arith.constant 4.000000e+00 : f32
    %142 = vector.broadcast %cst_86 : f32 to vector<2x128xf32>
    %143 = arith.mulf %142, %141 : vector<2x128xf32>
    %c0_87 = arith.constant 0 : index
    %c0_88 = arith.constant 0 : index
    %144 = vector.load %arg8[%c0_87, %c0_88] : memref<2x128xf32, #tpu.memory_space<vmem>>, vector<2x128xf32>
    tpu.vector_store %arg8[%c0_87, %c0_88], %143 {strides = array<i32>} : memref<2x128xf32, #tpu.memory_space<vmem>>, vector<2x128xf32>,
    %cst_89 = arith.constant 0.000000e+00 : f32
    %145 = vector.broadcast %cst_89 : f32 to vector<2x128xf32>
    %146 = arith.subf %145, %141 : vector<2x128xf32>
    %147 = arith.mulf %146, %141 : vector<2x128xf32>
    %148 = math.log1p %147 : vector<2x128xf32>
    %cst_90 = arith.constant 2.77258873 : f32
    %149 = vector.broadcast %cst_90 : f32 to vector<1x128xf32>
    %150 = arith.addf %139, %149 : vector<1x128xf32>
    %151 = vector.extract_strided_slice %148 {offsets = [0, 0], sizes = [1, 128], strides = [1, 1]} : vector<2x128xf32> to vector<1x128xf32>
    %152 = arith.addf %150, %151 : vector<1x128xf32>
    %153 = vector.extract_strided_slice %148 {offsets = [1, 0], sizes = [1, 128], strides = [1, 1]} : vector<2x128xf32> to vector<1x128xf32>
    %154 = arith.addf %152, %153 : vector<1x128xf32>
    %c0_91 = arith.constant 0 : index
    %c0_92 = arith.constant 0 : index
    %155 = vector.load %arg9[%c0_91, %c0_92] : memref<1x128xf32, #tpu.memory_space<vmem>>, vector<1x128xf32>
    tpu.vector_store %arg9[%c0_91, %c0_92], %154 {strides = array<i32>} : memref<1x128xf32, #tpu.memory_space<vmem>>, vector<1x128xf32>,
    return
  }
  func.func @transform_0(%arg0: i32) -> (i32, i32) {
    %c0_i32 = arith.constant 0 : i32
    %c0_i32_0 = arith.constant 0 : i32
    return %c0_i32, %arg0 : i32, i32
  }
  func.func @transform_1(%arg0: i32) -> (i32, i32, i32) {
    %c0_i32 = arith.constant 0 : i32
    %c0_i32_0 = arith.constant 0 : i32
    %c0_i32_1 = arith.constant 0 : i32
    %c0_i32_2 = arith.constant 0 : i32
    return %c0_i32, %c0_i32_0, %c0_i32_1 : i32, i32, i32
  }
  func.func @transform_2(%arg0: i32) -> (i32, i32, i32) {
    %c0_i32 = arith.constant 0 : i32
    %c0_i32_0 = arith.constant 0 : i32
    %c0_i32_1 = arith.constant 0 : i32
    %c0_i32_2 = arith.constant 0 : i32
    return %c0_i32, %c0_i32_0, %c0_i32_1 : i32, i32, i32
  }
  func.func @transform_3(%arg0: i32) -> (i32, i32, i32) {
    %c0_i32 = arith.constant 0 : i32
    %c0_i32_0 = arith.constant 0 : i32
    %c0_i32_1 = arith.constant 0 : i32
    %c0_i32_2 = arith.constant 0 : i32
    return %c0_i32, %c0_i32_0, %c0_i32_1 : i32, i32, i32
  }
  func.func @transform_4(%arg0: i32) -> (i32, i32, i32) {
    %c0_i32 = arith.constant 0 : i32
    %c0_i32_0 = arith.constant 0 : i32
    %c0_i32_1 = arith.constant 0 : i32
    %c0_i32_2 = arith.constant 0 : i32
    return %c0_i32, %c0_i32_0, %c0_i32_1 : i32, i32, i32
  }
  func.func @transform_5(%arg0: i32) -> (i32, i32, i32) {
    %c0_i32 = arith.constant 0 : i32
    %c0_i32_0 = arith.constant 0 : i32
    %c0_i32_1 = arith.constant 0 : i32
    %c0_i32_2 = arith.constant 0 : i32
    return %c0_i32, %c0_i32_0, %c0_i32_1 : i32, i32, i32
  }
  func.func @transform_6(%arg0: i32) -> (i32, i32, i32) {
    %c0_i32 = arith.constant 0 : i32
    %c0_i32_0 = arith.constant 0 : i32
    %c0_i32_1 = arith.constant 0 : i32
    %c0_i32_2 = arith.constant 0 : i32
    return %c0_i32, %c0_i32_0, %c0_i32_1 : i32, i32, i32
  }
  func.func @transform_7(%arg0: i32) -> (i32, i32) {
    %c0_i32 = arith.constant 0 : i32
    %c0_i32_0 = arith.constant 0 : i32
    return %c0_i32, %arg0 : i32, i32
  }
  func.func @transform_8(%arg0: i32) -> (i32, i32) {
    %c0_i32 = arith.constant 0 : i32
    %c0_i32_0 = arith.constant 0 : i32
    return %c0_i32, %arg0 : i32, i32
  }
}

</mosaic_0001>

<llo_original>
// kernel: tpu_custom_call.1
$region0: #{tpu_custom_call.1}
  #allocation0 [shape = 'u32[]', space=smem, size = 0x4, offset = 0x4, fixed_abs, tag = 'smem constant byte address 0x4 - core index']
  #allocation1 [shape = 'u32[144,128]{1,0:T(1,128)}', space=vmem, size = 0x12000, scoped, tag = 'internal scratch']
  %s0 = inlined_call_operand.vmem [shape: f32[2,128], index: 0, kind: input, shape index: {}]
  %s1 = inlined_call_operand.vmem [shape: f32[4,64,1], index: 1, kind: input, shape index: {}]
  %s2 = inlined_call_operand.vmem [shape: f32[4,64,1], index: 2, kind: input, shape index: {}]
  %s3 = inlined_call_operand.vmem [shape: f32[4,64,64], index: 3, kind: input, shape index: {}]
  %s4 = inlined_call_operand.vmem [shape: f32[4,64,1], index: 4, kind: input, shape index: {}]
  %s5 = inlined_call_operand.vmem [shape: f32[4,8,64], index: 5, kind: input, shape index: {}]
  %s6 = inlined_call_operand.vmem [shape: f32[4,8,1], index: 6, kind: input, shape index: {}]
  %s7 = inlined_call_operand.hbm [shape: f32[2,128], index: 7, kind: output, shape index: {0}]
  %s8 = inlined_call_operand.hbm [shape: f32[1,128], index: 8, kind: output, shape index: {1}]
  %9 = xla_tuple %s7, %s8
  %s10 = sld [smem:[#allocation0]]
  $region46: #{tpu_custom_call.1} parent=0
    _
  %s12 = ssub.s32 1, %s10
  %s13 = scalar_select 0, %s12, %s10
  $region1: #{tpu_custom_call.1} parent=0
    #allocation2 [shape = 'u8[1024]{0}', space=vmem, size = 0x400, scoped, tag = 'output window, operand 0, single buffered']
    #allocation3 [shape = 's32[1]{0}', space=sflag, size = 0x4, scoped, tag = 'scoped memory for tpu_custom_call.1']
    #allocation4 [shape = 'u8[512]{0}', space=vmem, size = 0x400, scoped, tag = 'output window, operand 1, single buffered']
    #allocation5 [shape = 's32[1]{0}', space=sflag, size = 0x4, scoped, tag = 'scoped memory for tpu_custom_call.1']
    %14 = vsyncpa [#allocation3], 0
    %15 = vsyncpa [#allocation5], 0
    // Predicated region
    $region2: #{tpu_custom_call.1} parent=1 // pred_check
      _
    $region3: #{tpu_custom_call.1} parent=1 // pred_check_branch
      %17 = sbr.rel (0) target = $region5
    $region4: #{tpu_custom_call.1} parent=1 // pred_region
      _
    $region5: #{tpu_custom_call.1} parent=1 // pred_fallthru
      _
    // Predicated region
    $region6: #{tpu_custom_call.1} parent=1 // pred_check
      _
    $region7: #{tpu_custom_call.1} parent=1 // pred_check_branch
      %19 = sbr.rel (0) target = $region9
    $region8: #{tpu_custom_call.1} parent=1 // pred_region
      _
    $region9: #{tpu_custom_call.1} parent=1 // pred_fallthru
      _
    // Predicated region
    $region10: #{tpu_custom_call.1} parent=1 // pred_check
      _
    $region11: #{tpu_custom_call.1} parent=1 // pred_check_branch
      %21 = sbr.rel (0) target = $region13
    $region12: #{tpu_custom_call.1} parent=1 // pred_region
      _
    $region13: #{tpu_custom_call.1} parent=1 // pred_fallthru
      _
    // Predicated region
    $region14: #{tpu_custom_call.1} parent=1 // pred_check
      _
    $region15: #{tpu_custom_call.1} parent=1 // pred_check_branch
      %23 = sbr.rel (0) target = $region17
    $region16: #{tpu_custom_call.1} parent=1 // pred_region
      _
    $region17: #{tpu_custom_call.1} parent=1 // pred_fallthru
      _
    // Predicated region
    $region18: #{tpu_custom_call.1} parent=1 // pred_check
      _
    $region19: #{tpu_custom_call.1} parent=1 // pred_check_branch
      %25 = sbr.rel (0) target = $region21
    $region20: #{tpu_custom_call.1} parent=1 // pred_region
      _
    $region21: #{tpu_custom_call.1} parent=1 // pred_fallthru
      _
    // Predicated region
    $region22: #{tpu_custom_call.1} parent=1 // pred_check
      _
    $region23: #{tpu_custom_call.1} parent=1 // pred_check_branch
      %27 = sbr.rel (0) target = $region25
    $region24: #{tpu_custom_call.1} parent=1 // pred_region
      _
    $region25: #{tpu_custom_call.1} parent=1 // pred_fallthru
      _
    // Predicated region
    $region26: #{tpu_custom_call.1} parent=1 // pred_check
      _
    $region27: #{tpu_custom_call.1} parent=1 // pred_check_branch
      %29 = sbr.rel (0) target = $region29
    $region28: #{tpu_custom_call.1} parent=1 // pred_region
      _
    $region29: #{tpu_custom_call.1} parent=1 // pred_fallthru
      _
    %v30 = vld [vmem:[%s0] sm:$0x3]
    %v31 = vld [vmem:[%s1] sm:$0xff]
    %v32 = vld [vmem:[%s1 + $0x8] sm:$0xff]
    %v33 = vld [vmem:[%s1 + $0x10] sm:$0xff]
    %v34 = vld [vmem:[%s1 + $0x18] sm:$0xff]
    %v35 = vld [vmem:[%s1 + $0x20] sm:$0xff]
    %v36 = vld [vmem:[%s1 + $0x28] sm:$0xff]
    %v37 = vld [vmem:[%s1 + $0x30] sm:$0xff]
    %v38 = vld [vmem:[%s1 + $0x38] sm:$0xff]
    %40 = vset.pattern.permute.xlu0 0
    %41 = vperm.xlu0 %40, %v31
    %v42 = vpop.permute.xlu0 %41
    %45 = vset.pattern.permute.xlu0 0
    %46 = vperm.xlu0 %45, %v32
    %v47 = vpop.permute.xlu0 %46
    %50 = vset.pattern.permute.xlu0 0
    %51 = vperm.xlu0 %50, %v33
    %v52 = vpop.permute.xlu0 %51
    %55 = vset.pattern.permute.xlu0 0
    %56 = vperm.xlu0 %55, %v34
    %v57 = vpop.permute.xlu0 %56
    %60 = vset.pattern.permute.xlu0 0
    %61 = vperm.xlu0 %60, %v35
    %v62 = vpop.permute.xlu0 %61
    %65 = vset.pattern.permute.xlu0 0
    %66 = vperm.xlu0 %65, %v36
    %v67 = vpop.permute.xlu0 %66
    %70 = vset.pattern.permute.xlu0 0
    %71 = vperm.xlu0 %70, %v37
    %v72 = vpop.permute.xlu0 %71
    %75 = vset.pattern.permute.xlu0 0
    %76 = vperm.xlu0 %75, %v38
    %v77 = vpop.permute.xlu0 %76
    %v79 = vlaneseq
    %v80 = vshrl.u32 %v79, 7
    %v81 = vsub.s32 1, %v80
    %v82 = vrot.slane %v30, %v81
    %v83 = vmul.f32 %v42, %v82
    %v84 = vmul.f32 %v47, %v82
    %v85 = vmul.f32 %v52, %v82
    %v86 = vmul.f32 %v57, %v82
    %v87 = vmul.f32 %v62, %v82
    %v88 = vmul.f32 %v67, %v82
    %v89 = vmul.f32 %v72, %v82
    %v90 = vmul.f32 %v77, %v82
    %v91 = vld [vmem:[%s2] sm:$0xff]
    %v92 = vld [vmem:[%s2 + $0x8] sm:$0xff]
    %v93 = vld [vmem:[%s2 + $0x10] sm:$0xff]
    %v94 = vld [vmem:[%s2 + $0x18] sm:$0xff]
    %v95 = vld [vmem:[%s2 + $0x20] sm:$0xff]
    %v96 = vld [vmem:[%s2 + $0x28] sm:$0xff]
    %v97 = vld [vmem:[%s2 + $0x30] sm:$0xff]
    %v98 = vld [vmem:[%s2 + $0x38] sm:$0xff]
    %100 = vset.pattern.permute.xlu0 0
    %101 = vperm.xlu0 %100, %v91
    %v102 = vpop.permute.xlu0 %101
    %105 = vset.pattern.permute.xlu0 0
    %106 = vperm.xlu0 %105, %v92
    %v107 = vpop.permute.xlu0 %106
    %110 = vset.pattern.permute.xlu0 0
    %111 = vperm.xlu0 %110, %v93
    %v112 = vpop.permute.xlu0 %111
    %115 = vset.pattern.permute.xlu0 0
    %116 = vperm.xlu0 %115, %v94
    %v117 = vpop.permute.xlu0 %116
    %120 = vset.pattern.permute.xlu0 0
    %121 = vperm.xlu0 %120, %v95
    %v122 = vpop.permute.xlu0 %121
    %125 = vset.pattern.permute.xlu0 0
    %126 = vperm.xlu0 %125, %v96
    %v127 = vpop.permute.xlu0 %126
    %130 = vset.pattern.permute.xlu0 0
    %131 = vperm.xlu0 %130, %v97
    %v132 = vpop.permute.xlu0 %131
    %135 = vset.pattern.permute.xlu0 0
    %136 = vperm.xlu0 %135, %v98
    %v137 = vpop.permute.xlu0 %136
    %v139 = vadd.f32 %v83, %v102
    %v140 = vadd.f32 %v84, %v107
    %v141 = vadd.f32 %v85, %v112
    %v142 = vadd.f32 %v86, %v117
    %v143 = vadd.f32 %v87, %v122
    %v144 = vadd.f32 %v88, %v127
    %v145 = vadd.f32 %v89, %v132
    %v146 = vadd.f32 %v90, %v137
    %v147 = vmax.f32 %v139, 0.0
    %v148 = vmax.f32 %v140, 0.0
    %v149 = vmax.f32 %v141, 0.0
    %v150 = vmax.f32 %v142, 0.0
    %v151 = vmax.f32 %v143, 0.0
    %v152 = vmax.f32 %v144, 0.0
    %v153 = vmax.f32 %v145, 0.0
    %v154 = vmax.f32 %v146, 0.0
    %v155 = vld [vmem:[%s3] sm:$0xff]
    %v156 = vld [vmem:[%s3 + $0x8] sm:$0xff]
    %v157 = vld [vmem:[%s3 + $0x10] sm:$0xff]
    %v158 = vld [vmem:[%s3 + $0x18] sm:$0xff]
    %v159 = vld [vmem:[%s3 + $0x20] sm:$0xff]
    %v160 = vld [vmem:[%s3 + $0x28] sm:$0xff]
    %v161 = vld [vmem:[%s3 + $0x30] sm:$0xff]
    %v162 = vld [vmem:[%s3 + $0x38] sm:$0xff]
    %v163 = vld [vmem:[%s4] sm:$0xff]
    %v164 = vld [vmem:[%s4 + $0x8] sm:$0xff]
    %v165 = vld [vmem:[%s4 + $0x10] sm:$0xff]
    %v166 = vld [vmem:[%s4 + $0x18] sm:$0xff]
    %v167 = vld [vmem:[%s4 + $0x20] sm:$0xff]
    %v168 = vld [vmem:[%s4 + $0x28] sm:$0xff]
    %v169 = vld [vmem:[%s4 + $0x30] sm:$0xff]
    %v170 = vld [vmem:[%s4 + $0x38] sm:$0xff]
    %172 = vset.pattern.permute.xlu0 0
    %173 = vperm.xlu0 %172, %v163
    %v174 = vpop.permute.xlu0 %173
    %177 = vset.pattern.permute.xlu0 0
    %178 = vperm.xlu0 %177, %v164
    %v179 = vpop.permute.xlu0 %178
    %182 = vset.pattern.permute.xlu0 0
    %183 = vperm.xlu0 %182, %v165
    %v184 = vpop.permute.xlu0 %183
    %187 = vset.pattern.permute.xlu0 0
    %188 = vperm.xlu0 %187, %v166
    %v189 = vpop.permute.xlu0 %188
    %192 = vset.pattern.permute.xlu0 0
    %193 = vperm.xlu0 %192, %v167
    %v194 = vpop.permute.xlu0 %193
    %197 = vset.pattern.permute.xlu0 0
    %198 = vperm.xlu0 %197, %v168
    %v199 = vpop.permute.xlu0 %198
    %202 = vset.pattern.permute.xlu0 0
    %203 = vperm.xlu0 %202, %v169
    %v204 = vpop.permute.xlu0 %203
    %207 = vset.pattern.permute.xlu0 0
    %208 = vperm.xlu0 %207, %v170
    %v209 = vpop.permute.xlu0 %208
    %vm211 = vcmask 523264
    %v213 = vsel %vm211, %v155, 0
    %v216 = vsel %vm211, %v156, 0
    %v219 = vsel %vm211, %v157, 0
    %v222 = vsel %vm211, %v158, 0
    %v225 = vsel %vm211, %v159, 0
    %v228 = vsel %vm211, %v160, 0
    %v231 = vsel %vm211, %v161, 0
    %v234 = vsel %vm211, %v162, 0
    %236 = vmatprep.subr.mxu0 0.0
    %237 = vmatpush1.msra.mxu0 %v147
    %238 = vmatprep.subr.mxu0 0.0
    %239 = vmatpush1.msra.mxu0 %v148
    %240 = vmatprep.subr.mxu0 0.0
    %241 = vmatpush1.msra.mxu0 %v149
    %242 = vmatprep.subr.mxu0 0.0
    %243 = vmatpush1.msra.mxu0 %v150
    %244 = vmatprep.subr.mxu0 0.0
    %245 = vmatpush1.msra.mxu0 %v151
    %246 = vmatprep.subr.mxu0 0.0
    %247 = vmatpush1.msra.mxu0 %v152
    %248 = vmatprep.subr.mxu0 0.0
    %249 = vmatpush1.msra.mxu0 %v153
    %250 = vmatprep.subr.mxu0 0.0
    %251 = vmatpush1.msra.mxu0 %v154
    %252 = vmatprep.subr.mxu0 0.0
    %253 = vmatpush1.msra.mxu0 0.0
    %254 = vmatprep.subr.mxu0 0.0
    %255 = vmatpush1.msra.mxu0 0.0
    %256 = vmatprep.subr.mxu0 0.0
    %257 = vmatpush1.msra.mxu0 0.0
    %258 = vmatprep.subr.mxu0 0.0
    %259 = vmatpush1.msra.mxu0 0.0
    %260 = vmatprep.subr.mxu0 0.0
    %261 = vmatpush1.msra.mxu0 0.0
    %262 = vmatprep.subr.mxu0 0.0
    %263 = vmatpush1.msra.mxu0 0.0
    %264 = vmatprep.subr.mxu0 0.0
    %265 = vmatpush1.msra.mxu0 0.0
    %266 = vmatprep.subr.mxu0 0.0
    %267 = vmatpush1.msra.mxu0 0.0
    %268 = vmatprep.subr.mxu0 0.0
    %269 = vmatpush1.msra.mxu0 0.0
    %270 = vmatprep.subr.mxu0 0.0
    %271 = vmatpush1.msra.mxu0 0.0
    %272 = vmatprep.subr.mxu0 0.0
    %273 = vmatpush1.msra.mxu0 0.0
    %274 = vmatprep.subr.mxu0 0.0
    %275 = vmatpush1.msra.mxu0 0.0
    %276 = vmatprep.subr.mxu0 0.0
    %277 = vmatpush1.msra.mxu0 0.0
    %278 = vmatprep.subr.mxu0 0.0
    %279 = vmatpush1.msra.mxu0 0.0
    %280 = vmatprep.subr.mxu0 0.0
    %281 = vmatpush1.msra.mxu0 0.0
    %282 = vmatprep.subr.mxu0 0.0
    %283 = vmatpush1.msra.mxu0 0.0
    %284 = vmatprep.subr.mxu0 0.0
    %285 = vmatpush1.msra.mxu0 0.0
    %286 = vmatprep.subr.mxu0 0.0
    %287 = vmatpush1.msra.mxu0 0.0
    %288 = vmatprep.subr.mxu0 0.0
    %289 = vmatpush1.msra.mxu0 0.0
    %290 = vmatprep.subr.mxu0 0.0
    %291 = vmatpush1.msra.mxu0 0.0
    %292 = vmatprep.subr.mxu0 0.0
    %293 = vmatpush1.msra.mxu0 0.0
    %294 = vmatprep.subr.mxu0 0.0
    %295 = vmatpush1.msra.mxu0 0.0
    %296 = vmatprep.subr.mxu0 0.0
    %297 = vmatpush1.msra.mxu0 0.0
    %298 = vmatprep.subr.mxu0 0.0
    %299 = vmatpush1.msra.mxu0 0.0
    %300 = vmatprep.mubr.f32.mxu0 0.0
    %301 = vmatmul.mubr.f32.gmra.mrb[0].mxu0 %v213
    %v302 = vpop.f32.mrb[0].mxu0
    %v303 = vadd.f32 %v174, %v302
    %v304 = vpop.f32.mrb[0].mxu0
    %305 = vmatprep.mubr.f32.mxu0 0.0
    %306 = vmatmul.mubr.f32.gmra.mrb[0].mxu0 %v216
    %v307 = vpop.f32.mrb[0].mxu0
    %v308 = vadd.f32 %v179, %v307
    %v309 = vpop.f32.mrb[0].mxu0
    %310 = vmatprep.mubr.f32.mxu0 0.0
    %311 = vmatmul.mubr.f32.gmra.mrb[0].mxu0 %v219
    %v312 = vpop.f32.mrb[0].mxu0
    %v313 = vadd.f32 %v184, %v312
    %v314 = vpop.f32.mrb[0].mxu0
    %315 = vmatprep.mubr.f32.mxu0 0.0
    %316 = vmatmul.mubr.f32.gmra.mrb[0].mxu0 %v222
    %v317 = vpop.f32.mrb[0].mxu0
    %v318 = vadd.f32 %v189, %v317
    %v319 = vpop.f32.mrb[0].mxu0
    %320 = vmatprep.mubr.f32.mxu0 0.0
    %321 = vmatmul.mubr.f32.gmra.mrb[0].mxu0 %v225
    %v322 = vpop.f32.mrb[0].mxu0
    %v323 = vadd.f32 %v194, %v322
    %v324 = vpop.f32.mrb[0].mxu0
    %325 = vmatprep.mubr.f32.mxu0 0.0
    %326 = vmatmul.mubr.f32.gmra.mrb[0].mxu0 %v228
    %v327 = vpop.f32.mrb[0].mxu0
    %v328 = vadd.f32 %v199, %v327
    %v329 = vpop.f32.mrb[0].mxu0
    %330 = vmatprep.mubr.f32.mxu0 0.0
    %331 = vmatmul.mubr.f32.gmra.mrb[0].mxu0 %v231
    %v332 = vpop.f32.mrb[0].mxu0
    %v333 = vadd.f32 %v204, %v332
    %v334 = vpop.f32.mrb[0].mxu0
    %335 = vmatprep.mubr.f32.mxu0 0.0
    %336 = vmatmul.mubr.f32.gmra.mrb[0].mxu0 %v234
    %v337 = vpop.f32.mrb[0].mxu0
    %v338 = vadd.f32 %v209, %v337
    %v339 = vpop.f32.mrb[0].mxu0
    %340 = vdwg.mxu0
    %v341 = vmax.f32 %v303, 0.0
    %v342 = vmax.f32 %v308, 0.0
    %v343 = vmax.f32 %v313, 0.0
    %v344 = vmax.f32 %v318, 0.0
    %v345 = vmax.f32 %v323, 0.0
    %v346 = vmax.f32 %v328, 0.0
    %v347 = vmax.f32 %v333, 0.0
    %v348 = vmax.f32 %v338, 0.0
    %v349 = vld [vmem:[%s5] sm:$0xff]
    %v350 = vld [vmem:[%s6] sm:$0xff]
    %352 = vset.pattern.permute.xlu0 0
    %353 = vperm.xlu0 %352, %v350
    %v354 = vpop.permute.xlu0 %353
    %v357 = vsel %vm211, %v349, 0
    %359 = vmatprep.subr.mxu0 0.0
    %360 = vmatpush1.msra.mxu0 %v341
    %361 = vmatprep.subr.mxu0 0.0
    %362 = vmatpush1.msra.mxu0 %v342
    %363 = vmatprep.subr.mxu0 0.0
    %364 = vmatpush1.msra.mxu0 %v343
    %365 = vmatprep.subr.mxu0 0.0
    %366 = vmatpush1.msra.mxu0 %v344
    %367 = vmatprep.subr.mxu0 0.0
    %368 = vmatpush1.msra.mxu0 %v345
    %369 = vmatprep.subr.mxu0 0.0
    %370 = vmatpush1.msra.mxu0 %v346
    %371 = vmatprep.subr.mxu0 0.0
    %372 = vmatpush1.msra.mxu0 %v347
    %373 = vmatprep.subr.mxu0 0.0
    %374 = vmatpush1.msra.mxu0 %v348
    %375 = vmatprep.subr.mxu0 0.0
    %376 = vmatpush1.msra.mxu0 0.0
    %377 = vmatprep.subr.mxu0 0.0
    %378 = vmatpush1.msra.mxu0 0.0
    %379 = vmatprep.subr.mxu0 0.0
    %380 = vmatpush1.msra.mxu0 0.0
    %381 = vmatprep.subr.mxu0 0.0
    %382 = vmatpush1.msra.mxu0 0.0
    %383 = vmatprep.subr.mxu0 0.0
    %384 = vmatpush1.msra.mxu0 0.0
    %385 = vmatprep.subr.mxu0 0.0
    %386 = vmatpush1.msra.mxu0 0.0
    %387 = vmatprep.subr.mxu0 0.0
    %388 = vmatpush1.msra.mxu0 0.0
    %389 = vmatprep.subr.mxu0 0.0
    %390 = vmatpush1.msra.mxu0 0.0
    %391 = vmatprep.subr.mxu0 0.0
    %392 = vmatpush1.msra.mxu0 0.0
    %393 = vmatprep.subr.mxu0 0.0
    %394 = vmatpush1.msra.mxu0 0.0
    %395 = vmatprep.subr.mxu0 0.0
    %396 = vmatpush1.msra.mxu0 0.0
    %397 = vmatprep.subr.mxu0 0.0
    %398 = vmatpush1.msra.mxu0 0.0
    %399 = vmatprep.subr.mxu0 0.0
    %400 = vmatpush1.msra.mxu0 0.0
    %401 = vmatprep.subr.mxu0 0.0
    %402 = vmatpush1.msra.mxu0 0.0
    %403 = vmatprep.subr.mxu0 0.0
    %404 = vmatpush1.msra.mxu0 0.0
    %405 = vmatprep.subr.mxu0 0.0
    %406 = vmatpush1.msra.mxu0 0.0
    %407 = vmatprep.subr.mxu0 0.0
    %408 = vmatpush1.msra.mxu0 0.0
    %409 = vmatprep.subr.mxu0 0.0
    %410 = vmatpush1.msra.mxu0 0.0
    %411 = vmatprep.subr.mxu0 0.0
    %412 = vmatpush1.msra.mxu0 0.0
    %413 = vmatprep.subr.mxu0 0.0
    %414 = vmatpush1.msra.mxu0 0.0
    %415 = vmatprep.subr.mxu0 0.0
    %416 = vmatpush1.msra.mxu0 0.0
    %417 = vmatprep.subr.mxu0 0.0
    %418 = vmatpush1.msra.mxu0 0.0
    %419 = vmatprep.subr.mxu0 0.0
    %420 = vmatpush1.msra.mxu0 0.0
    %421 = vmatprep.subr.mxu0 0.0
    %422 = vmatpush1.msra.mxu0 0.0
    %423 = vmatprep.mubr.f32.mxu0 0.0
    %424 = vmatmul.mubr.f32.gmra.mrb[0].mxu0 %v357
    %v425 = vpop.f32.mrb[0].mxu0
    %v426 = vadd.f32 %v354, %v425
    %v427 = vpop.f32.mrb[0].mxu0
    %428 = vdwg.mxu0
    %v429 = vtanh.pop %v426
    %v430 = vmul.f32 %v429, 1.442695
    %v431 = vpow.pop %v430
    %v432 = vmul.f32 %v30, %v431
    %v434 = vrot.slane %v426, 1
    %v436 = vadd.f32 %v432, %v434
    %v437 = vadd.f32 %v429, 0.0
    %s438 = scalar_lea.vmem %s1, 64
    %v439 = vld [vmem:[%s438] sm:$0xff]
    %v440 = vld [vmem:[%s438 + $0x8] sm:$0xff]
    %v441 = vld [vmem:[%s438 + $0x10] sm:$0xff]
    %v442 = vld [vmem:[%s438 + $0x18] sm:$0xff]
    %v443 = vld [vmem:[%s438 + $0x20] sm:$0xff]
    %v444 = vld [vmem:[%s438 + $0x28] sm:$0xff]
    %v445 = vld [vmem:[%s438 + $0x30] sm:$0xff]
    %v446 = vld [vmem:[%s438 + $0x38] sm:$0xff]
    %448 = vset.pattern.permute.xlu0 0
    %449 = vperm.xlu0 %448, %v439
    %v450 = vpop.permute.xlu0 %449
    %453 = vset.pattern.permute.xlu0 0
    %454 = vperm.xlu0 %453, %v440
    %v455 = vpop.permute.xlu0 %454
    %458 = vset.pattern.permute.xlu0 0
    %459 = vperm.xlu0 %458, %v441
    %v460 = vpop.permute.xlu0 %459
    %463 = vset.pattern.permute.xlu0 0
    %464 = vperm.xlu0 %463, %v442
    %v465 = vpop.permute.xlu0 %464
    %468 = vset.pattern.permute.xlu0 0
    %469 = vperm.xlu0 %468, %v443
    %v470 = vpop.permute.xlu0 %469
    %473 = vset.pattern.permute.xlu0 0
    %474 = vperm.xlu0 %473, %v444
    %v475 = vpop.permute.xlu0 %474
    %478 = vset.pattern.permute.xlu0 0
    %479 = vperm.xlu0 %478, %v445
    %v480 = vpop.permute.xlu0 %479
    %483 = vset.pattern.permute.xlu0 0
    %484 = vperm.xlu0 %483, %v446
    %v485 = vpop.permute.xlu0 %484
    %v487 = vlaneseq
    %v488 = vshrl.u32 %v487, 7
    %v489 = vsub.s32 0, %v488
    %v490 = vrot.slane %v436, %v489
    %v491 = vmul.f32 %v450, %v490
    %v492 = vmul.f32 %v455, %v490
    %v493 = vmul.f32 %v460, %v490
    %v494 = vmul.f32 %v465, %v490
    %v495 = vmul.f32 %v470, %v490
    %v496 = vmul.f32 %v475, %v490
    %v497 = vmul.f32 %v480, %v490
    %v498 = vmul.f32 %v485, %v490
    %s499 = scalar_lea.vmem %s2, 64
    %v500 = vld [vmem:[%s499] sm:$0xff]
    %v501 = vld [vmem:[%s499 + $0x8] sm:$0xff]
    %v502 = vld [vmem:[%s499 + $0x10] sm:$0xff]
    %v503 = vld [vmem:[%s499 + $0x18] sm:$0xff]
    %v504 = vld [vmem:[%s499 + $0x20] sm:$0xff]
    %v505 = vld [vmem:[%s499 + $0x28] sm:$0xff]
    %v506 = vld [vmem:[%s499 + $0x30] sm:$0xff]
    %v507 = vld [vmem:[%s499 + $0x38] sm:$0xff]
    %509 = vset.pattern.permute.xlu0 0
    %510 = vperm.xlu0 %509, %v500
    %v511 = vpop.permute.xlu0 %510
    %514 = vset.pattern.permute.xlu0 0
    %515 = vperm.xlu0 %514, %v501
    %v516 = vpop.permute.xlu0 %515
    %519 = vset.pattern.permute.xlu0 0
    %520 = vperm.xlu0 %519, %v502
    %v521 = vpop.permute.xlu0 %520
    %524 = vset.pattern.permute.xlu0 0
    %525 = vperm.xlu0 %524, %v503
    %v526 = vpop.permute.xlu0 %525
    %529 = vset.pattern.permute.xlu0 0
    %530 = vperm.xlu0 %529, %v504
    %v531 = vpop.permute.xlu0 %530
    %534 = vset.pattern.permute.xlu0 0
    %535 = vperm.xlu0 %534, %v505
    %v536 = vpop.permute.xlu0 %535
    %539 = vset.pattern.permute.xlu0 0
    %540 = vperm.xlu0 %539, %v506
    %v541 = vpop.permute.xlu0 %540
    %544 = vset.pattern.permute.xlu0 0
    %545 = vperm.xlu0 %544, %v507
    %v546 = vpop.permute.xlu0 %545
    %v548 = vadd.f32 %v491, %v511
    %v549 = vadd.f32 %v492, %v516
    %v550 = vadd.f32 %v493, %v521
    %v551 = vadd.f32 %v494, %v526
    %v552 = vadd.f32 %v495, %v531
    %v553 = vadd.f32 %v496, %v536
    %v554 = vadd.f32 %v497, %v541
    %v555 = vadd.f32 %v498, %v546
    %v556 = vmax.f32 %v548, 0.0
    %v557 = vmax.f32 %v549, 0.0
    %v558 = vmax.f32 %v550, 0.0
    %v559 = vmax.f32 %v551, 0.0
    %v560 = vmax.f32 %v552, 0.0
    %v561 = vmax.f32 %v553, 0.0
    %v562 = vmax.f32 %v554, 0.0
    %v563 = vmax.f32 %v555, 0.0
    %s564 = scalar_lea.vmem %s3, 64
    %v565 = vld [vmem:[%s564] sm:$0xff]
    %v566 = vld [vmem:[%s564 + $0x8] sm:$0xff]
    %v567 = vld [vmem:[%s564 + $0x10] sm:$0xff]
    %v568 = vld [vmem:[%s564 + $0x18] sm:$0xff]
    %v569 = vld [vmem:[%s564 + $0x20] sm:$0xff]
    %v570 = vld [vmem:[%s564 + $0x28] sm:$0xff]
    %v571 = vld [vmem:[%s564 + $0x30] sm:$0xff]
    %v572 = vld [vmem:[%s564 + $0x38] sm:$0xff]
    %s573 = scalar_lea.vmem %s4, 64
    %v574 = vld [vmem:[%s573] sm:$0xff]
    %v575 = vld [vmem:[%s573 + $0x8] sm:$0xff]
    %v576 = vld [vmem:[%s573 + $0x10] sm:$0xff]
    %v577 = vld [vmem:[%s573 + $0x18] sm:$0xff]
    %v578 = vld [vmem:[%s573 + $0x20] sm:$0xff]
    %v579 = vld [vmem:[%s573 + $0x28] sm:$0xff]
    %v580 = vld [vmem:[%s573 + $0x30] sm:$0xff]
    %v581 = vld [vmem:[%s573 + $0x38] sm:$0xff]
    %583 = vset.pattern.permute.xlu0 0
    %584 = vperm.xlu0 %583, %v574
    %v585 = vpop.permute.xlu0 %584
    %588 = vset.pattern.permute.xlu0 0
    %589 = vperm.xlu0 %588, %v575
    %v590 = vpop.permute.xlu0 %589
    %593 = vset.pattern.permute.xlu0 0
    %594 = vperm.xlu0 %593, %v576
    %v595 = vpop.permute.xlu0 %594
    %598 = vset.pattern.permute.xlu0 0
    %599 = vperm.xlu0 %598, %v577
    %v600 = vpop.permute.xlu0 %599
    %603 = vset.pattern.permute.xlu0 0
    %604 = vperm.xlu0 %603, %v578
    %v605 = vpop.permute.xlu0 %604
    %608 = vset.pattern.permute.xlu0 0
    %609 = vperm.xlu0 %608, %v579
    %v610 = vpop.permute.xlu0 %609
    %613 = vset.pattern.permute.xlu0 0
    %614 = vperm.xlu0 %613, %v580
    %v615 = vpop.permute.xlu0 %614
    %618 = vset.pattern.permute.xlu0 0
    %619 = vperm.xlu0 %618, %v581
    %v620 = vpop.permute.xlu0 %619
    %v623 = vsel %vm211, %v565, 0
    %v626 = vsel %vm211, %v566, 0
    %v629 = vsel %vm211, %v567, 0
    %v632 = vsel %vm211, %v568, 0
    %v635 = vsel %vm211, %v569, 0
    %v638 = vsel %vm211, %v570, 0
    %v641 = vsel %vm211, %v571, 0
    %v644 = vsel %vm211, %v572, 0
    %646 = vmatprep.subr.mxu0 0.0
    %647 = vmatpush1.msra.mxu0 %v556
    %648 = vmatprep.subr.mxu0 0.0
    %649 = vmatpush1.msra.mxu0 %v557
    %650 = vmatprep.subr.mxu0 0.0
    %651 = vmatpush1.msra.mxu0 %v558
    %652 = vmatprep.subr.mxu0 0.0
    %653 = vmatpush1.msra.mxu0 %v559
    %654 = vmatprep.subr.mxu0 0.0
    %655 = vmatpush1.msra.mxu0 %v560
    %656 = vmatprep.subr.mxu0 0.0
    %657 = vmatpush1.msra.mxu0 %v561
    %658 = vmatprep.subr.mxu0 0.0
    %659 = vmatpush1.msra.mxu0 %v562
    %660 = vmatprep.subr.mxu0 0.0
    %661 = vmatpush1.msra.mxu0 %v563
    %662 = vmatprep.subr.mxu0 0.0
    %663 = vmatpush1.msra.mxu0 0.0
    %664 = vmatprep.subr.mxu0 0.0
    %665 = vmatpush1.msra.mxu0 0.0
    %666 = vmatprep.subr.mxu0 0.0
    %667 = vmatpush1.msra.mxu0 0.0
    %668 = vmatprep.subr.mxu0 0.0
    %669 = vmatpush1.msra.mxu0 0.0
    %670 = vmatprep.subr.mxu0 0.0
    %671 = vmatpush1.msra.mxu0 0.0
    %672 = vmatprep.subr.mxu0 0.0
    %673 = vmatpush1.msra.mxu0 0.0
    %674 = vmatprep.subr.mxu0 0.0
    %675 = vmatpush1.msra.mxu0 0.0
    %676 = vmatprep.subr.mxu0 0.0
    %677 = vmatpush1.msra.mxu0 0.0
    %678 = vmatprep.subr.mxu0 0.0
    %679 = vmatpush1.msra.mxu0 0.0
    %680 = vmatprep.subr.mxu0 0.0
    %681 = vmatpush1.msra.mxu0 0.0
    %682 = vmatprep.subr.mxu0 0.0
    %683 = vmatpush1.msra.mxu0 0.0
    %684 = vmatprep.subr.mxu0 0.0
    %685 = vmatpush1.msra.mxu0 0.0
    %686 = vmatprep.subr.mxu0 0.0
    %687 = vmatpush1.msra.mxu0 0.0
    %688 = vmatprep.subr.mxu0 0.0
    %689 = vmatpush1.msra.mxu0 0.0
    %690 = vmatprep.subr.mxu0 0.0
    %691 = vmatpush1.msra.mxu0 0.0
    %692 = vmatprep.subr.mxu0 0.0
    %693 = vmatpush1.msra.mxu0 0.0
    %694 = vmatprep.subr.mxu0 0.0
    %695 = vmatpush1.msra.mxu0 0.0
    %696 = vmatprep.subr.mxu0 0.0
    %697 = vmatpush1.msra.mxu0 0.0
    %698 = vmatprep.subr.mxu0 0.0
    %699 = vmatpush1.msra.mxu0 0.0
    %700 = vmatprep.subr.mxu0 0.0
    %701 = vmatpush1.msra.mxu0 0.0
    %702 = vmatprep.subr.mxu0 0.0
    %703 = vmatpush1.msra.mxu0 0.0
    %704 = vmatprep.subr.mxu0 0.0
    %705 = vmatpush1.msra.mxu0 0.0
    %706 = vmatprep.subr.mxu0 0.0
    %707 = vmatpush1.msra.mxu0 0.0
    %708 = vmatprep.subr.mxu0 0.0
    %709 = vmatpush1.msra.mxu0 0.0
    %710 = vmatprep.mubr.f32.mxu0 0.0
    %711 = vmatmul.mubr.f32.gmra.mrb[0].mxu0 %v623
    %v712 = vpop.f32.mrb[0].mxu0
    %v713 = vadd.f32 %v585, %v712
    %v714 = vpop.f32.mrb[0].mxu0
    %715 = vmatprep.mubr.f32.mxu0 0.0
    %716 = vmatmul.mubr.f32.gmra.mrb[0].mxu0 %v626
    %v717 = vpop.f32.mrb[0].mxu0
    %v718 = vadd.f32 %v590, %v717
    %v719 = vpop.f32.mrb[0].mxu0
    %720 = vmatprep.mubr.f32.mxu0 0.0
    %721 = vmatmul.mubr.f32.gmra.mrb[0].mxu0 %v629
    %v722 = vpop.f32.mrb[0].mxu0
    %v723 = vadd.f32 %v595, %v722
    %v724 = vpop.f32.mrb[0].mxu0
    %725 = vmatprep.mubr.f32.mxu0 0.0
    %726 = vmatmul.mubr.f32.gmra.mrb[0].mxu0 %v632
    %v727 = vpop.f32.mrb[0].mxu0
    %v728 = vadd.f32 %v600, %v727
    %v729 = vpop.f32.mrb[0].mxu0
    %730 = vmatprep.mubr.f32.mxu0 0.0
    %731 = vmatmul.mubr.f32.gmra.mrb[0].mxu0 %v635
    %v732 = vpop.f32.mrb[0].mxu0
    %v733 = vadd.f32 %v605, %v732
    %v734 = vpop.f32.mrb[0].mxu0
    %735 = vmatprep.mubr.f32.mxu0 0.0
    %736 = vmatmul.mubr.f32.gmra.mrb[0].mxu0 %v638
    %v737 = vpop.f32.mrb[0].mxu0
    %v738 = vadd.f32 %v610, %v737
    %v739 = vpop.f32.mrb[0].mxu0
    %740 = vmatprep.mubr.f32.mxu0 0.0
    %741 = vmatmul.mubr.f32.gmra.mrb[0].mxu0 %v641
    %v742 = vpop.f32.mrb[0].mxu0
    %v743 = vadd.f32 %v615, %v742
    %v744 = vpop.f32.mrb[0].mxu0
    %745 = vmatprep.mubr.f32.mxu0 0.0
    %746 = vmatmul.mubr.f32.gmra.mrb[0].mxu0 %v644
    %v747 = vpop.f32.mrb[0].mxu0
    %v748 = vadd.f32 %v620, %v747
    %v749 = vpop.f32.mrb[0].mxu0
    %750 = vdwg.mxu0
    %v751 = vmax.f32 %v713, 0.0
    %v752 = vmax.f32 %v718, 0.0
    %v753 = vmax.f32 %v723, 0.0
    %v754 = vmax.f32 %v728, 0.0
    %v755 = vmax.f32 %v733, 0.0
    %v756 = vmax.f32 %v738, 0.0
    %v757 = vmax.f32 %v743, 0.0
    %v758 = vmax.f32 %v748, 0.0
    %s759 = scalar_lea.vmem %s5, 8
    %v760 = vld [vmem:[%s759] sm:$0xff]
    %s761 = scalar_lea.vmem %s6, 8
    %v762 = vld [vmem:[%s761] sm:$0xff]
    %764 = vset.pattern.permute.xlu0 0
    %765 = vperm.xlu0 %764, %v762
    %v766 = vpop.permute.xlu0 %765
    %v769 = vsel %vm211, %v760, 0
    %771 = vmatprep.subr.mxu0 0.0
    %772 = vmatpush1.msra.mxu0 %v751
    %773 = vmatprep.subr.mxu0 0.0
    %774 = vmatpush1.msra.mxu0 %v752
    %775 = vmatprep.subr.mxu0 0.0
    %776 = vmatpush1.msra.mxu0 %v753
    %777 = vmatprep.subr.mxu0 0.0
    %778 = vmatpush1.msra.mxu0 %v754
    %779 = vmatprep.subr.mxu0 0.0
    %780 = vmatpush1.msra.mxu0 %v755
    %781 = vmatprep.subr.mxu0 0.0
    %782 = vmatpush1.msra.mxu0 %v756
    %783 = vmatprep.subr.mxu0 0.0
    %784 = vmatpush1.msra.mxu0 %v757
    %785 = vmatprep.subr.mxu0 0.0
    %786 = vmatpush1.msra.mxu0 %v758
    %787 = vmatprep.subr.mxu0 0.0
    %788 = vmatpush1.msra.mxu0 0.0
    %789 = vmatprep.subr.mxu0 0.0
    %790 = vmatpush1.msra.mxu0 0.0
    %791 = vmatprep.subr.mxu0 0.0
    %792 = vmatpush1.msra.mxu0 0.0
    %793 = vmatprep.subr.mxu0 0.0
    %794 = vmatpush1.msra.mxu0 0.0
    %795 = vmatprep.subr.mxu0 0.0
    %796 = vmatpush1.msra.mxu0 0.0
    %797 = vmatprep.subr.mxu0 0.0
    %798 = vmatpush1.msra.mxu0 0.0
    %799 = vmatprep.subr.mxu0 0.0
    %800 = vmatpush1.msra.mxu0 0.0
    %801 = vmatprep.subr.mxu0 0.0
    %802 = vmatpush1.msra.mxu0 0.0
    %803 = vmatprep.subr.mxu0 0.0
    %804 = vmatpush1.msra.mxu0 0.0
    %805 = vmatprep.subr.mxu0 0.0
    %806 = vmatpush1.msra.mxu0 0.0
    %807 = vmatprep.subr.mxu0 0.0
    %808 = vmatpush1.msra.mxu0 0.0
    %809 = vmatprep.subr.mxu0 0.0
    %810 = vmatpush1.msra.mxu0 0.0
    %811 = vmatprep.subr.mxu0 0.0
    %812 = vmatpush1.msra.mxu0 0.0
    %813 = vmatprep.subr.mxu0 0.0
    %814 = vmatpush1.msra.mxu0 0.0
    %815 = vmatprep.subr.mxu0 0.0
    %816 = vmatpush1.msra.mxu0 0.0
    %817 = vmatprep.subr.mxu0 0.0
    %818 = vmatpush1.msra.mxu0 0.0
    %819 = vmatprep.subr.mxu0 0.0
    %820 = vmatpush1.msra.mxu0 0.0
    %821 = vmatprep.subr.mxu0 0.0
    %822 = vmatpush1.msra.mxu0 0.0
    %823 = vmatprep.subr.mxu0 0.0
    %824 = vmatpush1.msra.mxu0 0.0
    %825 = vmatprep.subr.mxu0 0.0
    %826 = vmatpush1.msra.mxu0 0.0
    %827 = vmatprep.subr.mxu0 0.0
    %828 = vmatpush1.msra.mxu0 0.0
    %829 = vmatprep.subr.mxu0 0.0
    %830 = vmatpush1.msra.mxu0 0.0
    %831 = vmatprep.subr.mxu0 0.0
    %832 = vmatpush1.msra.mxu0 0.0
    %833 = vmatprep.subr.mxu0 0.0
    %834 = vmatpush1.msra.mxu0 0.0
    %835 = vmatprep.mubr.f32.mxu0 0.0
    %836 = vmatmul.mubr.f32.gmra.mrb[0].mxu0 %v769
    %v837 = vpop.f32.mrb[0].mxu0
    %v838 = vadd.f32 %v766, %v837
    %v839 = vpop.f32.mrb[0].mxu0
    %840 = vdwg.mxu0
    %v841 = vtanh.pop %v838
    %v842 = vmul.f32 %v841, 1.442695
    %v843 = vpow.pop %v842
    %v845 = vrot.slane %v843, 7
    %v847 = vmul.f32 %v30, %v845
    %v848 = vadd.f32 %v847, %v838
    %v849 = vadd.f32 %v437, %v841
    %s850 = scalar_lea.vmem %s1, 128
    %v851 = vld [vmem:[%s850] sm:$0xff]
    %v852 = vld [vmem:[%s850 + $0x8] sm:$0xff]
    %v853 = vld [vmem:[%s850 + $0x10] sm:$0xff]
    %v854 = vld [vmem:[%s850 + $0x18] sm:$0xff]
    %v855 = vld [vmem:[%s850 + $0x20] sm:$0xff]
    %v856 = vld [vmem:[%s850 + $0x28] sm:$0xff]
    %v857 = vld [vmem:[%s850 + $0x30] sm:$0xff]
    %v858 = vld [vmem:[%s850 + $0x38] sm:$0xff]
    %860 = vset.pattern.permute.xlu0 0
    %861 = vperm.xlu0 %860, %v851
    %v862 = vpop.permute.xlu0 %861
    %865 = vset.pattern.permute.xlu0 0
    %866 = vperm.xlu0 %865, %v852
    %v867 = vpop.permute.xlu0 %866
    %870 = vset.pattern.permute.xlu0 0
    %871 = vperm.xlu0 %870, %v853
    %v872 = vpop.permute.xlu0 %871
    %875 = vset.pattern.permute.xlu0 0
    %876 = vperm.xlu0 %875, %v854
    %v877 = vpop.permute.xlu0 %876
    %880 = vset.pattern.permute.xlu0 0
    %881 = vperm.xlu0 %880, %v855
    %v882 = vpop.permute.xlu0 %881
    %885 = vset.pattern.permute.xlu0 0
    %886 = vperm.xlu0 %885, %v856
    %v887 = vpop.permute.xlu0 %886
    %890 = vset.pattern.permute.xlu0 0
    %891 = vperm.xlu0 %890, %v857
    %v892 = vpop.permute.xlu0 %891
    %895 = vset.pattern.permute.xlu0 0
    %896 = vperm.xlu0 %895, %v858
    %v897 = vpop.permute.xlu0 %896
    %v899 = vlaneseq
    %v900 = vshrl.u32 %v899, 7
    %v901 = vsub.s32 1, %v900
    %v902 = vrot.slane %v848, %v901
    %v903 = vmul.f32 %v862, %v902
    %v904 = vmul.f32 %v867, %v902
    %v905 = vmul.f32 %v872, %v902
    %v906 = vmul.f32 %v877, %v902
    %v907 = vmul.f32 %v882, %v902
    %v908 = vmul.f32 %v887, %v902
    %v909 = vmul.f32 %v892, %v902
    %v910 = vmul.f32 %v897, %v902
    %s911 = scalar_lea.vmem %s2, 128
    %v912 = vld [vmem:[%s911] sm:$0xff]
    %v913 = vld [vmem:[%s911 + $0x8] sm:$0xff]
    %v914 = vld [vmem:[%s911 + $0x10] sm:$0xff]
    %v915 = vld [vmem:[%s911 + $0x18] sm:$0xff]
    %v916 = vld [vmem:[%s911 + $0x20] sm:$0xff]
    %v917 = vld [vmem:[%s911 + $0x28] sm:$0xff]
    %v918 = vld [vmem:[%s911 + $0x30] sm:$0xff]
    %v919 = vld [vmem:[%s911 + $0x38] sm:$0xff]
    %921 = vset.pattern.permute.xlu0 0
    %922 = vperm.xlu0 %921, %v912
    %v923 = vpop.permute.xlu0 %922
    %926 = vset.pattern.permute.xlu0 0
    %927 = vperm.xlu0 %926, %v913
    %v928 = vpop.permute.xlu0 %927
    %931 = vset.pattern.permute.xlu0 0
    %932 = vperm.xlu0 %931, %v914
    %v933 = vpop.permute.xlu0 %932
    %936 = vset.pattern.permute.xlu0 0
    %937 = vperm.xlu0 %936, %v915
    %v938 = vpop.permute.xlu0 %937
    %941 = vset.pattern.permute.xlu0 0
    %942 = vperm.xlu0 %941, %v916
    %v943 = vpop.permute.xlu0 %942
    %946 = vset.pattern.permute.xlu0 0
    %947 = vperm.xlu0 %946, %v917
    %v948 = vpop.permute.xlu0 %947
    %951 = vset.pattern.permute.xlu0 0
    %952 = vperm.xlu0 %951, %v918
    %v953 = vpop.permute.xlu0 %952
    %956 = vset.pattern.permute.xlu0 0
    %957 = vperm.xlu0 %956, %v919
    %v958 = vpop.permute.xlu0 %957
    %v960 = vadd.f32 %v903, %v923
    %v961 = vadd.f32 %v904, %v928
    %v962 = vadd.f32 %v905, %v933
    %v963 = vadd.f32 %v906, %v938
    %v964 = vadd.f32 %v907, %v943
    %v965 = vadd.f32 %v908, %v948
    %v966 = vadd.f32 %v909, %v953
    %v967 = vadd.f32 %v910, %v958
    %v968 = vmax.f32 %v960, 0.0
    %v969 = vmax.f32 %v961, 0.0
    %v970 = vmax.f32 %v962, 0.0
    %v971 = vmax.f32 %v963, 0.0
    %v972 = vmax.f32 %v964, 0.0
    %v973 = vmax.f32 %v965, 0.0
    %v974 = vmax.f32 %v966, 0.0
    %v975 = vmax.f32 %v967, 0.0
    %s976 = scalar_lea.vmem %s3, 128
    %v977 = vld [vmem:[%s976] sm:$0xff]
    %v978 = vld [vmem:[%s976 + $0x8] sm:$0xff]
    %v979 = vld [vmem:[%s976 + $0x10] sm:$0xff]
    %v980 = vld [vmem:[%s976 + $0x18] sm:$0xff]
    %v981 = vld [vmem:[%s976 + $0x20] sm:$0xff]
    %v982 = vld [vmem:[%s976 + $0x28] sm:$0xff]
    %v983 = vld [vmem:[%s976 + $0x30] sm:$0xff]
    %v984 = vld [vmem:[%s976 + $0x38] sm:$0xff]
    %s985 = scalar_lea.vmem %s4, 128
    %v986 = vld [vmem:[%s985] sm:$0xff]
    %v987 = vld [vmem:[%s985 + $0x8] sm:$0xff]
    %v988 = vld [vmem:[%s985 + $0x10] sm:$0xff]
    %v989 = vld [vmem:[%s985 + $0x18] sm:$0xff]
    %v990 = vld [vmem:[%s985 + $0x20] sm:$0xff]
    %v991 = vld [vmem:[%s985 + $0x28] sm:$0xff]
    %v992 = vld [vmem:[%s985 + $0x30] sm:$0xff]
    %v993 = vld [vmem:[%s985 + $0x38] sm:$0xff]
    %995 = vset.pattern.permute.xlu0 0
    %996 = vperm.xlu0 %995, %v986
    %v997 = vpop.permute.xlu0 %996
    %1000 = vset.pattern.permute.xlu0 0
    %1001 = vperm.xlu0 %1000, %v987
    %v1002 = vpop.permute.xlu0 %1001
    %1005 = vset.pattern.permute.xlu0 0
    %1006 = vperm.xlu0 %1005, %v988
    %v1007 = vpop.permute.xlu0 %1006
    %1010 = vset.pattern.permute.xlu0 0
    %1011 = vperm.xlu0 %1010, %v989
    %v1012 = vpop.permute.xlu0 %1011
    %1015 = vset.pattern.permute.xlu0 0
    %1016 = vperm.xlu0 %1015, %v990
    %v1017 = vpop.permute.xlu0 %1016
    %1020 = vset.pattern.permute.xlu0 0
    %1021 = vperm.xlu0 %1020, %v991
    %v1022 = vpop.permute.xlu0 %1021
    %1025 = vset.pattern.permute.xlu0 0
    %1026 = vperm.xlu0 %1025, %v992
    %v1027 = vpop.permute.xlu0 %1026
    %1030 = vset.pattern.permute.xlu0 0
    %1031 = vperm.xlu0 %1030, %v993
    %v1032 = vpop.permute.xlu0 %1031
    %v1035 = vsel %vm211, %v977, 0
    %v1038 = vsel %vm211, %v978, 0
    %v1041 = vsel %vm211, %v979, 0
    %v1044 = vsel %vm211, %v980, 0
    %v1047 = vsel %vm211, %v981, 0
    %v1050 = vsel %vm211, %v982, 0
    %v1053 = vsel %vm211, %v983, 0
    %v1056 = vsel %vm211, %v984, 0
    %1058 = vmatprep.subr.mxu0 0.0
    %1059 = vmatpush1.msra.mxu0 %v968
    %1060 = vmatprep.subr.mxu0 0.0
    %1061 = vmatpush1.msra.mxu0 %v969
    %1062 = vmatprep.subr.mxu0 0.0
    %1063 = vmatpush1.msra.mxu0 %v970
    %1064 = vmatprep.subr.mxu0 0.0
    %1065 = vmatpush1.msra.mxu0 %v971
    %1066 = vmatprep.subr.mxu0 0.0
    %1067 = vmatpush1.msra.mxu0 %v972
    %1068 = vmatprep.subr.mxu0 0.0
    %1069 = vmatpush1.msra.mxu0 %v973
    %1070 = vmatprep.subr.mxu0 0.0
    %1071 = vmatpush1.msra.mxu0 %v974
    %1072 = vmatprep.subr.mxu0 0.0
    %1073 = vmatpush1.msra.mxu0 %v975
    %1074 = vmatprep.subr.mxu0 0.0
    %1075 = vmatpush1.msra.mxu0 0.0
    %1076 = vmatprep.subr.mxu0 0.0
    %1077 = vmatpush1.msra.mxu0 0.0
    %1078 = vmatprep.subr.mxu0 0.0
    %1079 = vmatpush1.msra.mxu0 0.0
    %1080 = vmatprep.subr.mxu0 0.0
    %1081 = vmatpush1.msra.mxu0 0.0
    %1082 = vmatprep.subr.mxu0 0.0
    %1083 = vmatpush1.msra.mxu0 0.0
    %1084 = vmatprep.subr.mxu0 0.0
    %1085 = vmatpush1.msra.mxu0 0.0
    %1086 = vmatprep.subr.mxu0 0.0
    %1087 = vmatpush1.msra.mxu0 0.0
    %1088 = vmatprep.subr.mxu0 0.0
    %1089 = vmatpush1.msra.mxu0 0.0
    %1090 = vmatprep.subr.mxu0 0.0
    %1091 = vmatpush1.msra.mxu0 0.0
    %1092 = vmatprep.subr.mxu0 0.0
    %1093 = vmatpush1.msra.mxu0 0.0
    %1094 = vmatprep.subr.mxu0 0.0
    %1095 = vmatpush1.msra.mxu0 0.0
    %1096 = vmatprep.subr.mxu0 0.0
    %1097 = vmatpush1.msra.mxu0 0.0
    %1098 = vmatprep.subr.mxu0 0.0
    %1099 = vmatpush1.msra.mxu0 0.0
    %1100 = vmatprep.subr.mxu0 0.0
    %1101 = vmatpush1.msra.mxu0 0.0
    %1102 = vmatprep.subr.mxu0 0.0
    %1103 = vmatpush1.msra.mxu0 0.0
    %1104 = vmatprep.subr.mxu0 0.0
    %1105 = vmatpush1.msra.mxu0 0.0
    %1106 = vmatprep.subr.mxu0 0.0
    %1107 = vmatpush1.msra.mxu0 0.0
    %1108 = vmatprep.subr.mxu0 0.0
    %1109 = vmatpush1.msra.mxu0 0.0
    %1110 = vmatprep.subr.mxu0 0.0
    %1111 = vmatpush1.msra.mxu0 0.0
    %1112 = vmatprep.subr.mxu0 0.0
    %1113 = vmatpush1.msra.mxu0 0.0
    %1114 = vmatprep.subr.mxu0 0.0
    %1115 = vmatpush1.msra.mxu0 0.0
    %1116 = vmatprep.subr.mxu0 0.0
    %1117 = vmatpush1.msra.mxu0 0.0
    %1118 = vmatprep.subr.mxu0 0.0
    %1119 = vmatpush1.msra.mxu0 0.0
    %1120 = vmatprep.subr.mxu0 0.0
    %1121 = vmatpush1.msra.mxu0 0.0
    %1122 = vmatprep.mubr.f32.mxu0 0.0
    %1123 = vmatmul.mubr.f32.gmra.mrb[0].mxu0 %v1035
    %v1124 = vpop.f32.mrb[0].mxu0
    %v1125 = vadd.f32 %v997, %v1124
    %v1126 = vpop.f32.mrb[0].mxu0
    %1127 = vmatprep.mubr.f32.mxu0 0.0
    %1128 = vmatmul.mubr.f32.gmra.mrb[0].mxu0 %v1038
    %v1129 = vpop.f32.mrb[0].mxu0
    %v1130 = vadd.f32 %v1002, %v1129
    %v1131 = vpop.f32.mrb[0].mxu0
    %1132 = vmatprep.mubr.f32.mxu0 0.0
    %1133 = vmatmul.mubr.f32.gmra.mrb[0].mxu0 %v1041
    %v1134 = vpop.f32.mrb[0].mxu0
    %v1135 = vadd.f32 %v1007, %v1134
    %v1136 = vpop.f32.mrb[0].mxu0
    %1137 = vmatprep.mubr.f32.mxu0 0.0
    %1138 = vmatmul.mubr.f32.gmra.mrb[0].mxu0 %v1044
    %v1139 = vpop.f32.mrb[0].mxu0
    %v1140 = vadd.f32 %v1012, %v1139
    %v1141 = vpop.f32.mrb[0].mxu0
    %1142 = vmatprep.mubr.f32.mxu0 0.0
    %1143 = vmatmul.mubr.f32.gmra.mrb[0].mxu0 %v1047
    %v1144 = vpop.f32.mrb[0].mxu0
    %v1145 = vadd.f32 %v1017, %v1144
    %v1146 = vpop.f32.mrb[0].mxu0
    %1147 = vmatprep.mubr.f32.mxu0 0.0
    %1148 = vmatmul.mubr.f32.gmra.mrb[0].mxu0 %v1050
    %v1149 = vpop.f32.mrb[0].mxu0
    %v1150 = vadd.f32 %v1022, %v1149
    %v1151 = vpop.f32.mrb[0].mxu0
    %1152 = vmatprep.mubr.f32.mxu0 0.0
    %1153 = vmatmul.mubr.f32.gmra.mrb[0].mxu0 %v1053
    %v1154 = vpop.f32.mrb[0].mxu0
    %v1155 = vadd.f32 %v1027, %v1154
    %v1156 = vpop.f32.mrb[0].mxu0
    %1157 = vmatprep.mubr.f32.mxu0 0.0
    %1158 = vmatmul.mubr.f32.gmra.mrb[0].mxu0 %v1056
    %v1159 = vpop.f32.mrb[0].mxu0
    %v1160 = vadd.f32 %v1032, %v1159
    %v1161 = vpop.f32.mrb[0].mxu0
    %1162 = vdwg.mxu0
    %v1163 = vmax.f32 %v1125, 0.0
    %v1164 = vmax.f32 %v1130, 0.0
    %v1165 = vmax.f32 %v1135, 0.0
    %v1166 = vmax.f32 %v1140, 0.0
    %v1167 = vmax.f32 %v1145, 0.0
    %v1168 = vmax.f32 %v1150, 0.0
    %v1169 = vmax.f32 %v1155, 0.0
    %v1170 = vmax.f32 %v1160, 0.0
    %s1171 = scalar_lea.vmem %s5, 16
    %v1172 = vld [vmem:[%s1171] sm:$0xff]
    %s1173 = scalar_lea.vmem %s6, 16
    %v1174 = vld [vmem:[%s1173] sm:$0xff]
    %1176 = vset.pattern.permute.xlu0 0
    %1177 = vperm.xlu0 %1176, %v1174
    %v1178 = vpop.permute.xlu0 %1177
    %v1181 = vsel %vm211, %v1172, 0
    %1183 = vmatprep.subr.mxu0 0.0
    %1184 = vmatpush1.msra.mxu0 %v1163
    %1185 = vmatprep.subr.mxu0 0.0
    %1186 = vmatpush1.msra.mxu0 %v1164
    %1187 = vmatprep.subr.mxu0 0.0
    %1188 = vmatpush1.msra.mxu0 %v1165
    %1189 = vmatprep.subr.mxu0 0.0
    %1190 = vmatpush1.msra.mxu0 %v1166
    %1191 = vmatprep.subr.mxu0 0.0
    %1192 = vmatpush1.msra.mxu0 %v1167
    %1193 = vmatprep.subr.mxu0 0.0
    %1194 = vmatpush1.msra.mxu0 %v1168
    %1195 = vmatprep.subr.mxu0 0.0
    %1196 = vmatpush1.msra.mxu0 %v1169
    %1197 = vmatprep.subr.mxu0 0.0
    %1198 = vmatpush1.msra.mxu0 %v1170
    %1199 = vmatprep.subr.mxu0 0.0
    %1200 = vmatpush1.msra.mxu0 0.0
    %1201 = vmatprep.subr.mxu0 0.0
    %1202 = vmatpush1.msra.mxu0 0.0
    %1203 = vmatprep.subr.mxu0 0.0
    %1204 = vmatpush1.msra.mxu0 0.0
    %1205 = vmatprep.subr.mxu0 0.0
    %1206 = vmatpush1.msra.mxu0 0.0
    %1207 = vmatprep.subr.mxu0 0.0
    %1208 = vmatpush1.msra.mxu0 0.0
    %1209 = vmatprep.subr.mxu0 0.0
    %1210 = vmatpush1.msra.mxu0 0.0
    %1211 = vmatprep.subr.mxu0 0.0
    %1212 = vmatpush1.msra.mxu0 0.0
    %1213 = vmatprep.subr.mxu0 0.0
    %1214 = vmatpush1.msra.mxu0 0.0
    %1215 = vmatprep.subr.mxu0 0.0
    %1216 = vmatpush1.msra.mxu0 0.0
    %1217 = vmatprep.subr.mxu0 0.0
    %1218 = vmatpush1.msra.mxu0 0.0
    %1219 = vmatprep.subr.mxu0 0.0
    %1220 = vmatpush1.msra.mxu0 0.0
    %1221 = vmatprep.subr.mxu0 0.0
    %1222 = vmatpush1.msra.mxu0 0.0
    %1223 = vmatprep.subr.mxu0 0.0
    %1224 = vmatpush1.msra.mxu0 0.0
    %1225 = vmatprep.subr.mxu0 0.0
    %1226 = vmatpush1.msra.mxu0 0.0
    %1227 = vmatprep.subr.mxu0 0.0
    %1228 = vmatpush1.msra.mxu0 0.0
    %1229 = vmatprep.subr.mxu0 0.0
    %1230 = vmatpush1.msra.mxu0 0.0
    %1231 = vmatprep.subr.mxu0 0.0
    %1232 = vmatpush1.msra.mxu0 0.0
    %1233 = vmatprep.subr.mxu0 0.0
    %1234 = vmatpush1.msra.mxu0 0.0
    %1235 = vmatprep.subr.mxu0 0.0
    %1236 = vmatpush1.msra.mxu0 0.0
    %1237 = vmatprep.subr.mxu0 0.0
    %1238 = vmatpush1.msra.mxu0 0.0
    %1239 = vmatprep.subr.mxu0 0.0
    %1240 = vmatpush1.msra.mxu0 0.0
    %1241 = vmatprep.subr.mxu0 0.0
    %1242 = vmatpush1.msra.mxu0 0.0
    %1243 = vmatprep.subr.mxu0 0.0
    %1244 = vmatpush1.msra.mxu0 0.0
    %1245 = vmatprep.subr.mxu0 0.0
    %1246 = vmatpush1.msra.mxu0 0.0
    %1247 = vmatprep.mubr.f32.mxu0 0.0
    %1248 = vmatmul.mubr.f32.gmra.mrb[0].mxu0 %v1181
    %v1249 = vpop.f32.mrb[0].mxu0
    %v1250 = vadd.f32 %v1178, %v1249
    %v1251 = vpop.f32.mrb[0].mxu0
    %1252 = vdwg.mxu0
    %v1253 = vtanh.pop %v1250
    %v1254 = vmul.f32 %v1253, 1.442695
    %v1255 = vpow.pop %v1254
    %v1256 = vmul.f32 %v436, %v1255
    %v1258 = vrot.slane %v1250, 1
    %v1260 = vadd.f32 %v1256, %v1258
    %v1261 = vadd.f32 %v849, %v1253
    %s1262 = scalar_lea.vmem %s1, 192
    %v1263 = vld [vmem:[%s1262] sm:$0xff]
    %v1264 = vld [vmem:[%s1262 + $0x8] sm:$0xff]
    %v1265 = vld [vmem:[%s1262 + $0x10] sm:$0xff]
    %v1266 = vld [vmem:[%s1262 + $0x18] sm:$0xff]
    %v1267 = vld [vmem:[%s1262 + $0x20] sm:$0xff]
    %v1268 = vld [vmem:[%s1262 + $0x28] sm:$0xff]
    %v1269 = vld [vmem:[%s1262 + $0x30] sm:$0xff]
    %v1270 = vld [vmem:[%s1262 + $0x38] sm:$0xff]
    %1272 = vset.pattern.permute.xlu0 0
    %1273 = vperm.xlu0 %1272, %v1263
    %v1274 = vpop.permute.xlu0 %1273
    %1277 = vset.pattern.permute.xlu0 0
    %1278 = vperm.xlu0 %1277, %v1264
    %v1279 = vpop.permute.xlu0 %1278
    %1282 = vset.pattern.permute.xlu0 0
    %1283 = vperm.xlu0 %1282, %v1265
    %v1284 = vpop.permute.xlu0 %1283
    %1287 = vset.pattern.permute.xlu0 0
    %1288 = vperm.xlu0 %1287, %v1266
    %v1289 = vpop.permute.xlu0 %1288
    %1292 = vset.pattern.permute.xlu0 0
    %1293 = vperm.xlu0 %1292, %v1267
    %v1294 = vpop.permute.xlu0 %1293
    %1297 = vset.pattern.permute.xlu0 0
    %1298 = vperm.xlu0 %1297, %v1268
    %v1299 = vpop.permute.xlu0 %1298
    %1302 = vset.pattern.permute.xlu0 0
    %1303 = vperm.xlu0 %1302, %v1269
    %v1304 = vpop.permute.xlu0 %1303
    %1307 = vset.pattern.permute.xlu0 0
    %1308 = vperm.xlu0 %1307, %v1270
    %v1309 = vpop.permute.xlu0 %1308
    %v1311 = vlaneseq
    %v1312 = vshrl.u32 %v1311, 7
    %v1313 = vsub.s32 0, %v1312
    %v1314 = vrot.slane %v1260, %v1313
    %v1315 = vmul.f32 %v1274, %v1314
    %v1316 = vmul.f32 %v1279, %v1314
    %v1317 = vmul.f32 %v1284, %v1314
    %v1318 = vmul.f32 %v1289, %v1314
    %v1319 = vmul.f32 %v1294, %v1314
    %v1320 = vmul.f32 %v1299, %v1314
    %v1321 = vmul.f32 %v1304, %v1314
    %v1322 = vmul.f32 %v1309, %v1314
    %s1323 = scalar_lea.vmem %s2, 192
    %v1324 = vld [vmem:[%s1323] sm:$0xff]
    %v1325 = vld [vmem:[%s1323 + $0x8] sm:$0xff]
    %v1326 = vld [vmem:[%s1323 + $0x10] sm:$0xff]
    %v1327 = vld [vmem:[%s1323 + $0x18] sm:$0xff]
    %v1328 = vld [vmem:[%s1323 + $0x20] sm:$0xff]
    %v1329 = vld [vmem:[%s1323 + $0x28] sm:$0xff]
    %v1330 = vld [vmem:[%s1323 + $0x30] sm:$0xff]
    %v1331 = vld [vmem:[%s1323 + $0x38] sm:$0xff]
    %1333 = vset.pattern.permute.xlu0 0
    %1334 = vperm.xlu0 %1333, %v1324
    %v1335 = vpop.permute.xlu0 %1334
    %1338 = vset.pattern.permute.xlu0 0
    %1339 = vperm.xlu0 %1338, %v1325
    %v1340 = vpop.permute.xlu0 %1339
    %1343 = vset.pattern.permute.xlu0 0
    %1344 = vperm.xlu0 %1343, %v1326
    %v1345 = vpop.permute.xlu0 %1344
    %1348 = vset.pattern.permute.xlu0 0
    %1349 = vperm.xlu0 %1348, %v1327
    %v1350 = vpop.permute.xlu0 %1349
    %1353 = vset.pattern.permute.xlu0 0
    %1354 = vperm.xlu0 %1353, %v1328
    %v1355 = vpop.permute.xlu0 %1354
    %1358 = vset.pattern.permute.xlu0 0
    %1359 = vperm.xlu0 %1358, %v1329
    %v1360 = vpop.permute.xlu0 %1359
    %1363 = vset.pattern.permute.xlu0 0
    %1364 = vperm.xlu0 %1363, %v1330
    %v1365 = vpop.permute.xlu0 %1364
    %1368 = vset.pattern.permute.xlu0 0
    %1369 = vperm.xlu0 %1368, %v1331
    %v1370 = vpop.permute.xlu0 %1369
    %v1372 = vadd.f32 %v1315, %v1335
    %v1373 = vadd.f32 %v1316, %v1340
    %v1374 = vadd.f32 %v1317, %v1345
    %v1375 = vadd.f32 %v1318, %v1350
    %v1376 = vadd.f32 %v1319, %v1355
    %v1377 = vadd.f32 %v1320, %v1360
    %v1378 = vadd.f32 %v1321, %v1365
    %v1379 = vadd.f32 %v1322, %v1370
    %v1380 = vmax.f32 %v1372, 0.0
    %v1381 = vmax.f32 %v1373, 0.0
    %v1382 = vmax.f32 %v1374, 0.0
    %v1383 = vmax.f32 %v1375, 0.0
    %v1384 = vmax.f32 %v1376, 0.0
    %v1385 = vmax.f32 %v1377, 0.0
    %v1386 = vmax.f32 %v1378, 0.0
    %v1387 = vmax.f32 %v1379, 0.0
    %s1388 = scalar_lea.vmem %s3, 192
    %v1389 = vld [vmem:[%s1388] sm:$0xff]
    %v1390 = vld [vmem:[%s1388 + $0x8] sm:$0xff]
    %v1391 = vld [vmem:[%s1388 + $0x10] sm:$0xff]
    %v1392 = vld [vmem:[%s1388 + $0x18] sm:$0xff]
    %v1393 = vld [vmem:[%s1388 + $0x20] sm:$0xff]
    %v1394 = vld [vmem:[%s1388 + $0x28] sm:$0xff]
    %v1395 = vld [vmem:[%s1388 + $0x30] sm:$0xff]
    %v1396 = vld [vmem:[%s1388 + $0x38] sm:$0xff]
    %s1397 = scalar_lea.vmem %s4, 192
    %v1398 = vld [vmem:[%s1397] sm:$0xff]
    %v1399 = vld [vmem:[%s1397 + $0x8] sm:$0xff]
    %v1400 = vld [vmem:[%s1397 + $0x10] sm:$0xff]
    %v1401 = vld [vmem:[%s1397 + $0x18] sm:$0xff]
    %v1402 = vld [vmem:[%s1397 + $0x20] sm:$0xff]
    %v1403 = vld [vmem:[%s1397 + $0x28] sm:$0xff]
    %v1404 = vld [vmem:[%s1397 + $0x30] sm:$0xff]
    %v1405 = vld [vmem:[%s1397 + $0x38] sm:$0xff]
    %1407 = vset.pattern.permute.xlu0 0
    %1408 = vperm.xlu0 %1407, %v1398
    %v1409 = vpop.permute.xlu0 %1408
    %1412 = vset.pattern.permute.xlu0 0
    %1413 = vperm.xlu0 %1412, %v1399
    %v1414 = vpop.permute.xlu0 %1413
    %1417 = vset.pattern.permute.xlu0 0
    %1418 = vperm.xlu0 %1417, %v1400
    %v1419 = vpop.permute.xlu0 %1418
    %1422 = vset.pattern.permute.xlu0 0
    %1423 = vperm.xlu0 %1422, %v1401
    %v1424 = vpop.permute.xlu0 %1423
    %1427 = vset.pattern.permute.xlu0 0
    %1428 = vperm.xlu0 %1427, %v1402
    %v1429 = vpop.permute.xlu0 %1428
    %1432 = vset.pattern.permute.xlu0 0
    %1433 = vperm.xlu0 %1432, %v1403
    %v1434 = vpop.permute.xlu0 %1433
    %1437 = vset.pattern.permute.xlu0 0
    %1438 = vperm.xlu0 %1437, %v1404
    %v1439 = vpop.permute.xlu0 %1438
    %1442 = vset.pattern.permute.xlu0 0
    %1443 = vperm.xlu0 %1442, %v1405
    %v1444 = vpop.permute.xlu0 %1443
    %v1447 = vsel %vm211, %v1389, 0
    %v1450 = vsel %vm211, %v1390, 0
    %v1453 = vsel %vm211, %v1391, 0
    %v1456 = vsel %vm211, %v1392, 0
    %v1459 = vsel %vm211, %v1393, 0
    %v1462 = vsel %vm211, %v1394, 0
    %v1465 = vsel %vm211, %v1395, 0
    %v1468 = vsel %vm211, %v1396, 0
    %1470 = vmatprep.subr.mxu0 0.0
    %1471 = vmatpush1.msra.mxu0 %v1380
    %1472 = vmatprep.subr.mxu0 0.0
    %1473 = vmatpush1.msra.mxu0 %v1381
    %1474 = vmatprep.subr.mxu0 0.0
    %1475 = vmatpush1.msra.mxu0 %v1382
    %1476 = vmatprep.subr.mxu0 0.0
    %1477 = vmatpush1.msra.mxu0 %v1383
    %1478 = vmatprep.subr.mxu0 0.0
    %1479 = vmatpush1.msra.mxu0 %v1384
    %1480 = vmatprep.subr.mxu0 0.0
    %1481 = vmatpush1.msra.mxu0 %v1385
    %1482 = vmatprep.subr.mxu0 0.0
    %1483 = vmatpush1.msra.mxu0 %v1386
    %1484 = vmatprep.subr.mxu0 0.0
    %1485 = vmatpush1.msra.mxu0 %v1387
    %1486 = vmatprep.subr.mxu0 0.0
    %1487 = vmatpush1.msra.mxu0 0.0
    %1488 = vmatprep.subr.mxu0 0.0
    %1489 = vmatpush1.msra.mxu0 0.0
    %1490 = vmatprep.subr.mxu0 0.0
    %1491 = vmatpush1.msra.mxu0 0.0
    %1492 = vmatprep.subr.mxu0 0.0
    %1493 = vmatpush1.msra.mxu0 0.0
    %1494 = vmatprep.subr.mxu0 0.0
    %1495 = vmatpush1.msra.mxu0 0.0
    %1496 = vmatprep.subr.mxu0 0.0
    %1497 = vmatpush1.msra.mxu0 0.0
    %1498 = vmatprep.subr.mxu0 0.0
    %1499 = vmatpush1.msra.mxu0 0.0
    %1500 = vmatprep.subr.mxu0 0.0
    %1501 = vmatpush1.msra.mxu0 0.0
    %1502 = vmatprep.subr.mxu0 0.0
    %1503 = vmatpush1.msra.mxu0 0.0
    %1504 = vmatprep.subr.mxu0 0.0
    %1505 = vmatpush1.msra.mxu0 0.0
    %1506 = vmatprep.subr.mxu0 0.0
    %1507 = vmatpush1.msra.mxu0 0.0
    %1508 = vmatprep.subr.mxu0 0.0
    %1509 = vmatpush1.msra.mxu0 0.0
    %1510 = vmatprep.subr.mxu0 0.0
    %1511 = vmatpush1.msra.mxu0 0.0
    %1512 = vmatprep.subr.mxu0 0.0
    %1513 = vmatpush1.msra.mxu0 0.0
    %1514 = vmatprep.subr.mxu0 0.0
    %1515 = vmatpush1.msra.mxu0 0.0
    %1516 = vmatprep.subr.mxu0 0.0
    %1517 = vmatpush1.msra.mxu0 0.0
    %1518 = vmatprep.subr.mxu0 0.0
    %1519 = vmatpush1.msra.mxu0 0.0
    %1520 = vmatprep.subr.mxu0 0.0
    %1521 = vmatpush1.msra.mxu0 0.0
    %1522 = vmatprep.subr.mxu0 0.0
    %1523 = vmatpush1.msra.mxu0 0.0
    %1524 = vmatprep.subr.mxu0 0.0
    %1525 = vmatpush1.msra.mxu0 0.0
    %1526 = vmatprep.subr.mxu0 0.0
    %1527 = vmatpush1.msra.mxu0 0.0
    %1528 = vmatprep.subr.mxu0 0.0
    %1529 = vmatpush1.msra.mxu0 0.0
    %1530 = vmatprep.subr.mxu0 0.0
    %1531 = vmatpush1.msra.mxu0 0.0
    %1532 = vmatprep.subr.mxu0 0.0
    %1533 = vmatpush1.msra.mxu0 0.0
    %1534 = vmatprep.mubr.f32.mxu0 0.0
    %1535 = vmatmul.mubr.f32.gmra.mrb[0].mxu0 %v1447
    %v1536 = vpop.f32.mrb[0].mxu0
    %v1537 = vadd.f32 %v1409, %v1536
    %v1538 = vpop.f32.mrb[0].mxu0
    %1539 = vmatprep.mubr.f32.mxu0 0.0
    %1540 = vmatmul.mubr.f32.gmra.mrb[0].mxu0 %v1450
    %v1541 = vpop.f32.mrb[0].mxu0
    %v1542 = vadd.f32 %v1414, %v1541
    %v1543 = vpop.f32.mrb[0].mxu0
    %1544 = vmatprep.mubr.f32.mxu0 0.0
    %1545 = vmatmul.mubr.f32.gmra.mrb[0].mxu0 %v1453
    %v1546 = vpop.f32.mrb[0].mxu0
    %v1547 = vadd.f32 %v1419, %v1546
    %v1548 = vpop.f32.mrb[0].mxu0
    %1549 = vmatprep.mubr.f32.mxu0 0.0
    %1550 = vmatmul.mubr.f32.gmra.mrb[0].mxu0 %v1456
    %v1551 = vpop.f32.mrb[0].mxu0
    %v1552 = vadd.f32 %v1424, %v1551
    %v1553 = vpop.f32.mrb[0].mxu0
    %1554 = vmatprep.mubr.f32.mxu0 0.0
    %1555 = vmatmul.mubr.f32.gmra.mrb[0].mxu0 %v1459
    %v1556 = vpop.f32.mrb[0].mxu0
    %v1557 = vadd.f32 %v1429, %v1556
    %v1558 = vpop.f32.mrb[0].mxu0
    %1559 = vmatprep.mubr.f32.mxu0 0.0
    %1560 = vmatmul.mubr.f32.gmra.mrb[0].mxu0 %v1462
    %v1561 = vpop.f32.mrb[0].mxu0
    %v1562 = vadd.f32 %v1434, %v1561
    %v1563 = vpop.f32.mrb[0].mxu0
    %1564 = vmatprep.mubr.f32.mxu0 0.0
    %1565 = vmatmul.mubr.f32.gmra.mrb[0].mxu0 %v1465
    %v1566 = vpop.f32.mrb[0].mxu0
    %v1567 = vadd.f32 %v1439, %v1566
    %v1568 = vpop.f32.mrb[0].mxu0
    %1569 = vmatprep.mubr.f32.mxu0 0.0
    %1570 = vmatmul.mubr.f32.gmra.mrb[0].mxu0 %v1468
    %v1571 = vpop.f32.mrb[0].mxu0
    %v1572 = vadd.f32 %v1444, %v1571
    %v1573 = vpop.f32.mrb[0].mxu0
    %1574 = vdwg.mxu0
    %v1575 = vmax.f32 %v1537, 0.0
    %v1576 = vmax.f32 %v1542, 0.0
    %v1577 = vmax.f32 %v1547, 0.0
    %v1578 = vmax.f32 %v1552, 0.0
    %v1579 = vmax.f32 %v1557, 0.0
    %v1580 = vmax.f32 %v1562, 0.0
    %v1581 = vmax.f32 %v1567, 0.0
    %v1582 = vmax.f32 %v1572, 0.0
    %s1583 = scalar_lea.vmem %s5, 24
    %v1584 = vld [vmem:[%s1583] sm:$0xff]
    %s1585 = scalar_lea.vmem %s6, 24
    %v1586 = vld [vmem:[%s1585] sm:$0xff]
    %1588 = vset.pattern.permute.xlu0 0
    %1589 = vperm.xlu0 %1588, %v1586
    %v1590 = vpop.permute.xlu0 %1589
    %v1593 = vsel %vm211, %v1584, 0
    %1595 = vmatprep.subr.mxu0 0.0
    %1596 = vmatpush1.msra.mxu0 %v1575
    %1597 = vmatprep.subr.mxu0 0.0
    %1598 = vmatpush1.msra.mxu0 %v1576
    %1599 = vmatprep.subr.mxu0 0.0
    %1600 = vmatpush1.msra.mxu0 %v1577
    %1601 = vmatprep.subr.mxu0 0.0
    %1602 = vmatpush1.msra.mxu0 %v1578
    %1603 = vmatprep.subr.mxu0 0.0
    %1604 = vmatpush1.msra.mxu0 %v1579
    %1605 = vmatprep.subr.mxu0 0.0
    %1606 = vmatpush1.msra.mxu0 %v1580
    %1607 = vmatprep.subr.mxu0 0.0
    %1608 = vmatpush1.msra.mxu0 %v1581
    %1609 = vmatprep.subr.mxu0 0.0
    %1610 = vmatpush1.msra.mxu0 %v1582
    %1611 = vmatprep.subr.mxu0 0.0
    %1612 = vmatpush1.msra.mxu0 0.0
    %1613 = vmatprep.subr.mxu0 0.0
    %1614 = vmatpush1.msra.mxu0 0.0
    %1615 = vmatprep.subr.mxu0 0.0
    %1616 = vmatpush1.msra.mxu0 0.0
    %1617 = vmatprep.subr.mxu0 0.0
    %1618 = vmatpush1.msra.mxu0 0.0
    %1619 = vmatprep.subr.mxu0 0.0
    %1620 = vmatpush1.msra.mxu0 0.0
    %1621 = vmatprep.subr.mxu0 0.0
    %1622 = vmatpush1.msra.mxu0 0.0
    %1623 = vmatprep.subr.mxu0 0.0
    %1624 = vmatpush1.msra.mxu0 0.0
    %1625 = vmatprep.subr.mxu0 0.0
    %1626 = vmatpush1.msra.mxu0 0.0
    %1627 = vmatprep.subr.mxu0 0.0
    %1628 = vmatpush1.msra.mxu0 0.0
    %1629 = vmatprep.subr.mxu0 0.0
    %1630 = vmatpush1.msra.mxu0 0.0
    %1631 = vmatprep.subr.mxu0 0.0
    %1632 = vmatpush1.msra.mxu0 0.0
    %1633 = vmatprep.subr.mxu0 0.0
    %1634 = vmatpush1.msra.mxu0 0.0
    %1635 = vmatprep.subr.mxu0 0.0
    %1636 = vmatpush1.msra.mxu0 0.0
    %1637 = vmatprep.subr.mxu0 0.0
    %1638 = vmatpush1.msra.mxu0 0.0
    %1639 = vmatprep.subr.mxu0 0.0
    %1640 = vmatpush1.msra.mxu0 0.0
    %1641 = vmatprep.subr.mxu0 0.0
    %1642 = vmatpush1.msra.mxu0 0.0
    %1643 = vmatprep.subr.mxu0 0.0
    %1644 = vmatpush1.msra.mxu0 0.0
    %1645 = vmatprep.subr.mxu0 0.0
    %1646 = vmatpush1.msra.mxu0 0.0
    %1647 = vmatprep.subr.mxu0 0.0
    %1648 = vmatpush1.msra.mxu0 0.0
    %1649 = vmatprep.subr.mxu0 0.0
    %1650 = vmatpush1.msra.mxu0 0.0
    %1651 = vmatprep.subr.mxu0 0.0
    %1652 = vmatpush1.msra.mxu0 0.0
    %1653 = vmatprep.subr.mxu0 0.0
    %1654 = vmatpush1.msra.mxu0 0.0
    %1655 = vmatprep.subr.mxu0 0.0
    %1656 = vmatpush1.msra.mxu0 0.0
    %1657 = vmatprep.subr.mxu0 0.0
    %1658 = vmatpush1.msra.mxu0 0.0
    %1659 = vmatprep.mubr.f32.mxu0 0.0
    %1660 = vmatmul.mubr.f32.gmra.mrb[0].mxu0 %v1593
    %v1661 = vpop.f32.mrb[0].mxu0
    %v1662 = vadd.f32 %v1590, %v1661
    %v1663 = vpop.f32.mrb[0].mxu0
    %1664 = vdwg.mxu0
    %v1665 = vtanh.pop %v1662
    %v1666 = vmul.f32 %v1665, 1.442695
    %v1667 = vpow.pop %v1666
    %v1669 = vrot.slane %v1667, 7
    %v1671 = vmul.f32 %v848, %v1669
    %v1672 = vadd.f32 %v1671, %v1662
    %v1673 = vadd.f32 %v1261, %v1665
    %vm1674 = vcmask 1040384
    %v1675 = vsel %vm1674, %v1260, %v1672
    %v1676 = vtanh.pop %v1675
    %v1677 = vmul.f32 %v1676, 4.0
    %1678 = vst [vmem:[#allocation2] sm:$0x3] %v1677
    %v1679 = vsub.f32 0.0, %v1676
    %v1680 = vmul.f32 %v1679, %v1676
    %v1681 = vadd.f32 %v1680, 1.0
    %v1682 = vlog2.pop %v1681
    %v1683 = vmul.f32 %v1682, 0.6931472
    %v1684 = vmul.f32 -0.5, %v1680
    %v1685 = vadd.f32 %v1684, 1.0
    %v1686 = vmul.f32 %v1685, %v1680
    %v1687 = vand.u32 2147483647, %v1680
    %vm1688 = vcmp.lt.f32.partialorder %v1687, 0.0004427343
    %v1689 = vsel %vm1688, %v1686, %v1683
    %v1690 = vadd.f32 %v1673, 2.7725887
    %v1691 = vadd.f32 %v1690, %v1689
    %v1693 = vrot.slane %v1689, 1
    %v1695 = vadd.f32 %v1691, %v1693
    %1696 = vst [vmem:[#allocation4] sm:$0x1] %v1695
    // Predicated region
    $region30: #{tpu_custom_call.1} parent=1 // pred_check
      _
    $region31: #{tpu_custom_call.1} parent=1 // pred_check_branch
      %1698 = sbr.rel (0) target = $region33
    $region32: #{tpu_custom_call.1} parent=1 // pred_region
      %s1700 = ssub.s32 32, 32
      %1701 = vsyncadd [#allocation3], %s1700
      %s1703 = sshll.u32 [#allocation2], 4
      %s1704 = int_to_ptr.vmem [resolvable:$true] %s1703
      %1706 = dma.vmem_to_hbm [thread:$0]  %s1704, 32, %s7, [#allocation3]
    $region33: #{tpu_custom_call.1} parent=1 // pred_fallthru
      _
    // Predicated region
    $region34: #{tpu_custom_call.1} parent=1 // pred_check
      _
    $region35: #{tpu_custom_call.1} parent=1 // pred_check_branch
      %1708 = sbr.rel (0) target = $region37
    $region36: #{tpu_custom_call.1} parent=1 // pred_region
      %s1710 = ssub.s32 16, 16
      %1711 = vsyncadd [#allocation5], %s1710
      %s1713 = sshll.u32 [#allocation4], 4
      %s1714 = int_to_ptr.vmem [resolvable:$true] %s1713
      %1716 = dma.vmem_to_hbm [thread:$0]  %s1714, 16, %s8, [#allocation5]
    $region37: #{tpu_custom_call.1} parent=1 // pred_fallthru
      _
    // Predicated region
    $region38: #{tpu_custom_call.1} parent=1 // pred_check
      _
    $region39: #{tpu_custom_call.1} parent=1 // pred_check_branch
      %1718 = sbr.rel (0) target = $region41
    $region40: #{tpu_custom_call.1} parent=1 // pred_region
      %1719 = dma.done [#allocation3], 32
    $region41: #{tpu_custom_call.1} parent=1 // pred_fallthru
      _
    // Predicated region
    $region42: #{tpu_custom_call.1} parent=1 // pred_check
      _
    $region43: #{tpu_custom_call.1} parent=1 // pred_check_branch
      %1721 = sbr.rel (0) target = $region45
    $region44: #{tpu_custom_call.1} parent=1 // pred_region
      %1722 = dma.done [#allocation5], 16
    $region45: #{tpu_custom_call.1} parent=1 // pred_fallthru
      _
    %1723 = vsyncpa [#allocation3], 1
    %1724 = vsyncpa [#allocation5], 1

</llo_original>
